<compile_context>
chip_gen: v7x
topology: tpu7x:2x2x1
jax: 0.10.0
libtpu: 0.0.40
codegen_flags: <defaults>
</compile_context>

<pallas_src>
import numpy as np

import jax
import jax.numpy as jnp
from jax import lax
from jax.experimental import pallas as pl
from jax.experimental.pallas import tpu as pltpu


def _vmem():
    return pl.BlockSpec(memory_space=pltpu.MemorySpace.VMEM)


# ------------------------------ fused kernel --------------------------------

def lenet5_kernel(x_ref,                    # (1, 32, 32) f32 input image (CHW)
                  t1_ref,                   # (5, 32, 168) bf16 conv1 Toeplitz
                  t2_ref,                   # (5, 84, 160) bf16 conv2 Toeplitz (K-fused)
                  w3_ref,                   # (5, 80, 120) bf16 conv3 weights
                  fw1_ref, fw2_ref,         # (120, 128), (128, 128) bf16 FC weights
                  bias_ref,                 # (5, 168) f32 packed biases
                  rs_ref,                   # (38, 28)  bf16 packed row selectors
                  cs_ref,                   # (328, 168) bf16 packed col selectors
                  o_ref):                   # (1, 10) f32 output probabilities
    f32 = jnp.float32
    bf16 = jnp.bfloat16

    x = x_ref[0].astype(bf16)                                      # (32, 32)

    # ---- conv1 (5x5, 1->6) + ReLU: 5 banded matmuls -> (28, 6*28) ----------
    acc1 = jnp.dot(x[0:28, :], t1_ref[0], preferred_element_type=f32)
    for kh in range(1, 5):
        acc1 = acc1 + jnp.dot(x[kh:kh + 28, :], t1_ref[kh],
                              preferred_element_type=f32)
    a1 = jnp.maximum(acc1 + bias_ref[0:1, :], 0.0).astype(bf16)    # (28, 168)

    # ---- maxpool1 2x2/2: one row-select matmul + one col-select matmul -----
    rs1 = rs_ref[0:28, 0:28]                                       # (28, 28)
    cs1 = cs_ref[0:168, :]                                         # (168, 168)
    tr = jnp.dot(rs1, a1, preferred_element_type=f32)              # (28, 168)
    v1 = jnp.maximum(tr[0:14, :], tr[14:28, :]).astype(bf16)       # (14, 168)
    tc = jnp.dot(v1, cs1, preferred_element_type=f32)              # (14, 168)
    p1 = jnp.maximum(tc[:, 0:84], tc[:, 84:168]).astype(bf16)      # (14, 84)

    # ---- conv2 (5x5, 6->16) + ReLU: 5 K=84 matmuls -> (10, 16*10) ----------
    acc2 = jnp.dot(p1[0:10, :], t2_ref[0], preferred_element_type=f32)
    for kh in range(1, 5):
        acc2 = acc2 + jnp.dot(p1[kh:kh + 10, :], t2_ref[kh],
                              preferred_element_type=f32)
    a2 = jnp.maximum(acc2 + bias_ref[1:2, 0:160], 0.0).astype(bf16)  # (10, 160)

    # ---- maxpool2 2x2/2 -> (5, 16*5) ---------------------------------------
    rs2 = rs_ref[28:38, 0:10]                                      # (10, 10)
    cs2 = cs_ref[168:328, 0:160]                                   # (160, 160)
    tr2 = jnp.dot(rs2, a2, preferred_element_type=f32)             # (10, 160)
    v2 = jnp.maximum(tr2[0:5, :], tr2[5:10, :]).astype(bf16)       # (5, 160)
    tc2 = jnp.dot(v2, cs2, preferred_element_type=f32)             # (5, 160)
    p2 = jnp.maximum(tc2[:, 0:80], tc2[:, 80:160]).astype(bf16)    # (5, 80)

    # ---- conv3 (5x5, 16->120) + ReLU -> (1, 120) ---------------------------
    acc3 = jnp.dot(p2[0:1, :], w3_ref[0], preferred_element_type=f32)
    for kh in range(1, 5):
        acc3 = acc3 + jnp.dot(p2[kh:kh + 1, :], w3_ref[kh],
                              preferred_element_type=f32)
    feat = jnp.maximum(acc3 + bias_ref[2:3, 0:120], 0.0).astype(bf16)  # (1, 120)

    # ---- FC head (lane-padded to 128) + softmax ----------------------------
    h = jnp.maximum(jnp.dot(feat, fw1_ref[...], preferred_element_type=f32)
                    + bias_ref[3:4, 0:128], 0.0).astype(bf16)      # (1, 128)
    z = (jnp.dot(h, fw2_ref[...], preferred_element_type=f32)
         + bias_ref[4:5, 0:128])                                   # (1, 128)
    z10 = z[:, 0:10]
    z10 = z10 - jnp.max(z10, axis=-1, keepdims=True)
    e = jnp.exp(z10)
    o_ref[...] = e / jnp.sum(e, axis=-1, keepdims=True)            # exact norm


# ------------------------------ pallas wrapper ------------------------------

@jax.jit
def lenet5_forward(x_chw, kp):
    # x_chw: PyTorch-style (1, 32, 32) CHW image.
    x = x_chw.astype(jnp.float32)
    return pl.pallas_call(
        lenet5_kernel,
        out_shape=jax.ShapeDtypeStruct((1, 10), jnp.float32),
        in_specs=[_vmem()] * 9,
        out_specs=_vmem(),
    )(x, kp["t1"], kp["t2"], kp["w3"], kp["fw1"], kp["fw2"],
      kp["bias"], kp["rs"], kp["cs"])


# -------------------------- parameter preparation ---------------------------

def init_params(key):
    # Deterministic synthetic parameters in PyTorch layouts
    # (conv: OIHW, linear: (out, in)).
    ks = jax.random.split(key, 10)
    return {
        "w1_t": 0.2 * jax.random.normal(ks[0], (6, 1, 5, 5), jnp.float32),
        "b1": 0.1 * jax.random.normal(ks[1], (6,), jnp.float32),
        "w2_t": 0.1 * jax.random.normal(ks[2], (16, 6, 5, 5), jnp.float32),
        "b2": 0.1 * jax.random.normal(ks[3], (16,), jnp.float32),
        "w3_t": 0.05 * jax.random.normal(ks[4], (120, 16, 5, 5), jnp.float32),
        "b3": 0.1 * jax.random.normal(ks[5], (120,), jnp.float32),
        "fw1_t": 0.1 * jax.random.normal(ks[6], (84, 120), jnp.float32),
        "fb1": 0.1 * jax.random.normal(ks[7], (84,), jnp.float32),
        "fw2_t": 0.1 * jax.random.normal(ks[8], (10, 84), jnp.float32),
        "fb2": 0.1 * jax.random.normal(ks[9], (10,), jnp.float32),
    }


def _toeplitz_conv1(w1):
    # OIHW (6,1,5,5) -> (5, 32, 6*28): T[kh, wo+kw, co*28+wo] = w1[co,0,kh,kw]
    w = np.asarray(w1, np.float32)
    t = np.zeros((5, 32, 6 * 28), np.float32)
    rng = np.arange(28)
    for kh in range(5):
        for kw in range(5):
            for co in range(6):
                t[kh, rng + kw, co * 28 + rng] = w[co, 0, kh, kw]
    return t


def _toeplitz_conv2(w2):
    # OIHW (16,6,5,5) -> (5, 6*14, 16*10), ci blocks concatenated along K:
    #   T[kh, ci*14 + wo+kw, co*10+wo] = w2[co,ci,kh,kw]
    w = np.asarray(w2, np.float32)
    t = np.zeros((5, 6 * 14, 16 * 10), np.float32)
    rng = np.arange(10)
    for kh in range(5):
        for ci in range(6):
            for kw in range(5):
                for co in range(16):
                    t[kh, ci * 14 + rng + kw, co * 10 + rng] = w[co, ci, kh, kw]
    return t


def _conv3_weights(w3):
    # OIHW (120,16,5,5) -> (5, 80, 120): W[kh, ci*5+kw, co] = w3[co,ci,kh,kw]
    w = np.asarray(w3, np.float32)
    return np.ascontiguousarray(np.transpose(w, (2, 1, 3, 0)).reshape(5, 80, 120))


def _row_sel_pair(p_out):
    # (2p, 2p): rows [0:p] pick even input rows, rows [p:2p] pick odd rows.
    m = np.zeros((2 * p_out, 2 * p_out), np.float32)
    idx = np.arange(p_out)
    m[idx, 2 * idx] = 1.0
    m[p_out + idx, 2 * idx + 1] = 1.0
    return m


def _col_sel_pair(c, p_out):
    # (c*2p, 2*c*p): cols [0:c*p] pick even cols per ci block, [c*p:2cp] odd.
    m = np.zeros((c * 2 * p_out, 2 * c * p_out), np.float32)
    rng = np.arange(p_out)
    for ci in range(c):
        m[ci * 2 * p_out + 2 * rng, ci * p_out + rng] = 1.0
        m[ci * 2 * p_out + 2 * rng + 1, c * p_out + ci * p_out + rng] = 1.0
    return m


def kernel_params(p):
    # FC weights, lane-padded to 128.
    fw1p = np.zeros((120, 128), np.float32)
    fw1p[:, :84] = np.asarray(p["fw1_t"], np.float32).T
    fw2p = np.zeros((128, 128), np.float32)
    fw2p[:84, :10] = np.asarray(p["fw2_t"], np.float32).T

    # Packed biases (kept f32), one row per stage, lane-padded to 168.
    bias = np.zeros((5, 168), np.float32)
    bias[0, :168] = np.repeat(np.asarray(p["b1"], np.float32), 28)
    bias[1, :160] = np.repeat(np.asarray(p["b2"], np.float32), 10)
    bias[2, :120] = np.asarray(p["b3"], np.float32)
    bias[3, :84] = np.asarray(p["fb1"], np.float32)
    bias[4, :10] = np.asarray(p["fb2"], np.float32)

    # Packed pooling selectors (0/1 -> exact in bf16).
    rs = np.zeros((38, 28), np.float32)
    rs[0:28, 0:28] = _row_sel_pair(14)
    rs[28:38, 0:10] = _row_sel_pair(5)
    cs = np.zeros((328, 168), np.float32)
    cs[0:168, 0:168] = _col_sel_pair(6, 14)
    cs[168:328, 0:160] = _col_sel_pair(16, 5)

    bf16_arrays = {
        "t1": _toeplitz_conv1(p["w1_t"]),
        "t2": _toeplitz_conv2(p["w2_t"]),
        "w3": _conv3_weights(p["w3_t"]),
        "fw1": fw1p, "fw2": fw2p,
        "rs": rs, "cs": cs,
    }
    kp = {k: jnp.asarray(v, jnp.bfloat16) for k, v in bf16_arrays.items()}
    kp["bias"] = jnp.asarray(bias, jnp.float32)
    return kp


# ------------------------------ pure-JAX reference ---------------------------

def lenet5_reference(x_chw, p):
    hi = lax.Precision.HIGHEST
    dn = ("NCHW", "OIHW", "NCHW")
    x = x_chw[None].astype(jnp.float32)                            # (1,1,32,32)
    a = lax.conv_general_dilated(x, p["w1_t"], (1, 1), "VALID",
                                 dimension_numbers=dn, precision=hi)
    a = jnp.maximum(a + p["b1"].reshape(1, -1, 1, 1), 0.0)
    a = lax.reduce_window(a, -jnp.inf, lax.max, (1, 1, 2, 2), (1, 1, 2, 2), "VALID")
    a = lax.conv_general_dilated(a, p["w2_t"], (1, 1), "VALID",
                                 dimension_numbers=dn, precision=hi)
    a = jnp.maximum(a + p["b2"].reshape(1, -1, 1, 1), 0.0)
    a = lax.reduce_window(a, -jnp.inf, lax.max, (1, 1, 2, 2), (1, 1, 2, 2), "VALID")
    a = lax.conv_general_dilated(a, p["w3_t"], (1, 1), "VALID",
                                 dimension_numbers=dn, precision=hi)
    a = jnp.maximum(a + p["b3"].reshape(1, -1, 1, 1), 0.0)
    feat = a.reshape(1, -1)                                        # (1, 120)
    h = jnp.maximum(jnp.dot(feat, p["fw1_t"].T, precision=hi) + p["fb1"], 0.0)
    z = jnp.dot(h, p["fw2_t"].T, precision=hi) + p["fb2"]
    return jax.nn.softmax(z, axis=-1)


if __name__ == "__main__":
    key = jax.random.PRNGKey(0)
    kx, kw = jax.random.split(key)
    x = jax.random.normal(kx, (1, 32, 32), jnp.float32)   # PyTorch CHW input (1,32,32)
    params = init_params(kw)
    kp = kernel_params(params)

    out = lenet5_forward(x, kp)
    out = jax.block_until_ready(out)

    ref = lenet5_reference(x, params)
    assert out.shape == (1, 10)
    assert bool(jnp.all(jnp.isfinite(out)))
    assert abs(float(jnp.sum(out)) - 1.0) < 1e-3
    assert bool(jnp.allclose(out, ref, atol=2e-2, rtol=2e-2))
    print("KERNEL_OK")
</pallas_src>

<mosaic_0001>
module attributes {stable_mosaic.version = 11 : i64} {
  func.func @lenet5_kernel(%arg0: memref<1x32x32xf32, #tpu.memory_space<vmem>>, %arg1: memref<5x32x168xbf16, #tpu.memory_space<vmem>>, %arg2: memref<5x84x160xbf16, #tpu.memory_space<vmem>>, %arg3: memref<5x80x120xbf16, #tpu.memory_space<vmem>>, %arg4: memref<120x128xbf16, #tpu.memory_space<vmem>>, %arg5: memref<128x128xbf16, #tpu.memory_space<vmem>>, %arg6: memref<5x168xf32, #tpu.memory_space<vmem>>, %arg7: memref<38x28xbf16, #tpu.memory_space<vmem>>, %arg8: memref<328x168xbf16, #tpu.memory_space<vmem>>, %arg9: memref<1x10xf32, #tpu.memory_space<vmem>>) attributes {dimension_semantics = [], scalar_prefetch = 0 : i64, scratch_operands = 0 : i64, tpu.core_type = #tpu.core_type<tc>} {
    %c0 = arith.constant 0 : index
    %c0_0 = arith.constant 0 : index
    %c0_1 = arith.constant 0 : index
    %0 = vector.load %arg0[%c0, %c0_0, %c0_1] : memref<1x32x32xf32, #tpu.memory_space<vmem>>, vector<1x32x32xf32>
    %1 = vector.shape_cast %0 : vector<1x32x32xf32> to vector<32x32xf32>
    %2 = arith.truncf %1 : vector<32x32xf32> to vector<32x32xbf16>
    %3 = vector.extract_strided_slice %2 {offsets = [0, 0], sizes = [28, 32], strides = [1, 1]} : vector<32x32xbf16> to vector<28x32xbf16>
    %c0_2 = arith.constant 0 : index
    %c0_3 = arith.constant 0 : index
    %c0_4 = arith.constant 0 : index
    %4 = vector.load %arg1[%c0_2, %c0_3, %c0_4] : memref<5x32x168xbf16, #tpu.memory_space<vmem>>, vector<1x32x168xbf16>
    %5 = vector.shape_cast %4 : vector<1x32x168xbf16> to vector<32x168xbf16>
    %cst = arith.constant dense<0.000000e+00> : vector<28x168xf32>
    %6 = tpu.matmul %3, %5, %cst {dimension_numbers = #tpu.dot_dimension_numbers<[1], [0], [0], [1], [0, 0, 1, 1], [], []>} : vector<28x32xbf16>, vector<32x168xbf16>, vector<28x168xf32> -> vector<28x168xf32>
    %7 = vector.extract_strided_slice %2 {offsets = [1, 0], sizes = [28, 32], strides = [1, 1]} : vector<32x32xbf16> to vector<28x32xbf16>
    %c1 = arith.constant 1 : index
    %c0_5 = arith.constant 0 : index
    %c0_6 = arith.constant 0 : index
    %8 = vector.load %arg1[%c1, %c0_5, %c0_6] : memref<5x32x168xbf16, #tpu.memory_space<vmem>>, vector<1x32x168xbf16>
    %9 = vector.shape_cast %8 : vector<1x32x168xbf16> to vector<32x168xbf16>
    %cst_7 = arith.constant dense<0.000000e+00> : vector<28x168xf32>
    %10 = tpu.matmul %7, %9, %cst_7 {dimension_numbers = #tpu.dot_dimension_numbers<[1], [0], [0], [1], [0, 0, 1, 1], [], []>} : vector<28x32xbf16>, vector<32x168xbf16>, vector<28x168xf32> -> vector<28x168xf32>
    %11 = arith.addf %6, %10 : vector<28x168xf32>
    %12 = vector.extract_strided_slice %2 {offsets = [2, 0], sizes = [28, 32], strides = [1, 1]} : vector<32x32xbf16> to vector<28x32xbf16>
    %c2 = arith.constant 2 : index
    %c0_8 = arith.constant 0 : index
    %c0_9 = arith.constant 0 : index
    %13 = vector.load %arg1[%c2, %c0_8, %c0_9] : memref<5x32x168xbf16, #tpu.memory_space<vmem>>, vector<1x32x168xbf16>
    %14 = vector.shape_cast %13 : vector<1x32x168xbf16> to vector<32x168xbf16>
    %cst_10 = arith.constant dense<0.000000e+00> : vector<28x168xf32>
    %15 = tpu.matmul %12, %14, %cst_10 {dimension_numbers = #tpu.dot_dimension_numbers<[1], [0], [0], [1], [0, 0, 1, 1], [], []>} : vector<28x32xbf16>, vector<32x168xbf16>, vector<28x168xf32> -> vector<28x168xf32>
    %16 = arith.addf %11, %15 : vector<28x168xf32>
    %17 = vector.extract_strided_slice %2 {offsets = [3, 0], sizes = [28, 32], strides = [1, 1]} : vector<32x32xbf16> to vector<28x32xbf16>
    %c3 = arith.constant 3 : index
    %c0_11 = arith.constant 0 : index
    %c0_12 = arith.constant 0 : index
    %18 = vector.load %arg1[%c3, %c0_11, %c0_12] : memref<5x32x168xbf16, #tpu.memory_space<vmem>>, vector<1x32x168xbf16>
    %19 = vector.shape_cast %18 : vector<1x32x168xbf16> to vector<32x168xbf16>
    %cst_13 = arith.constant dense<0.000000e+00> : vector<28x168xf32>
    %20 = tpu.matmul %17, %19, %cst_13 {dimension_numbers = #tpu.dot_dimension_numbers<[1], [0], [0], [1], [0, 0, 1, 1], [], []>} : vector<28x32xbf16>, vector<32x168xbf16>, vector<28x168xf32> -> vector<28x168xf32>
    %21 = arith.addf %16, %20 : vector<28x168xf32>
    %22 = vector.extract_strided_slice %2 {offsets = [4, 0], sizes = [28, 32], strides = [1, 1]} : vector<32x32xbf16> to vector<28x32xbf16>
    %c4 = arith.constant 4 : index
    %c0_14 = arith.constant 0 : index
    %c0_15 = arith.constant 0 : index
    %23 = vector.load %arg1[%c4, %c0_14, %c0_15] : memref<5x32x168xbf16, #tpu.memory_space<vmem>>, vector<1x32x168xbf16>
    %24 = vector.shape_cast %23 : vector<1x32x168xbf16> to vector<32x168xbf16>
    %cst_16 = arith.constant dense<0.000000e+00> : vector<28x168xf32>
    %25 = tpu.matmul %22, %24, %cst_16 {dimension_numbers = #tpu.dot_dimension_numbers<[1], [0], [0], [1], [0, 0, 1, 1], [], []>} : vector<28x32xbf16>, vector<32x168xbf16>, vector<28x168xf32> -> vector<28x168xf32>
    %26 = arith.addf %21, %25 : vector<28x168xf32>
    %c0_17 = arith.constant 0 : index
    %c0_18 = arith.constant 0 : index
    %27 = vector.load %arg6[%c0_17, %c0_18] : memref<5x168xf32, #tpu.memory_space<vmem>>, vector<1x168xf32>
    %28 = vector.broadcast %27 : vector<1x168xf32> to vector<28x168xf32>
    %29 = arith.addf %26, %28 : vector<28x168xf32>
    %cst_19 = arith.constant 0.000000e+00 : f32
    %30 = vector.broadcast %cst_19 : f32 to vector<28x168xf32>
    %31 = arith.maximumf %29, %30 : vector<28x168xf32>
    %32 = arith.truncf %31 : vector<28x168xf32> to vector<28x168xbf16>
    %c0_20 = arith.constant 0 : index
    %c0_21 = arith.constant 0 : index
    %33 = vector.load %arg7[%c0_20, %c0_21] : memref<38x28xbf16, #tpu.memory_space<vmem>>, vector<28x28xbf16>
    %c0_22 = arith.constant 0 : index
    %c0_23 = arith.constant 0 : index
    %34 = vector.load %arg8[%c0_22, %c0_23] : memref<328x168xbf16, #tpu.memory_space<vmem>>, vector<168x168xbf16>
    %cst_24 = arith.constant dense<0.000000e+00> : vector<28x168xf32>
    %35 = tpu.matmul %33, %32, %cst_24 {dimension_numbers = #tpu.dot_dimension_numbers<[1], [0], [0], [1], [0, 0, 1, 1], [], []>} : vector<28x28xbf16>, vector<28x168xbf16>, vector<28x168xf32> -> vector<28x168xf32>
    %36 = vector.extract_strided_slice %35 {offsets = [0, 0], sizes = [14, 168], strides = [1, 1]} : vector<28x168xf32> to vector<14x168xf32>
    %37 = vector.extract_strided_slice %35 {offsets = [14, 0], sizes = [14, 168], strides = [1, 1]} : vector<28x168xf32> to vector<14x168xf32>
    %38 = arith.maximumf %36, %37 : vector<14x168xf32>
    %39 = arith.truncf %38 : vector<14x168xf32> to vector<14x168xbf16>
    %cst_25 = arith.constant dense<0.000000e+00> : vector<14x168xf32>
    %40 = tpu.matmul %39, %34, %cst_25 {dimension_numbers = #tpu.dot_dimension_numbers<[1], [0], [0], [1], [0, 0, 1, 1], [], []>} : vector<14x168xbf16>, vector<168x168xbf16>, vector<14x168xf32> -> vector<14x168xf32>
    %41 = vector.extract_strided_slice %40 {offsets = [0, 0], sizes = [14, 84], strides = [1, 1]} : vector<14x168xf32> to vector<14x84xf32>
    %42 = vector.extract_strided_slice %40 {offsets = [0, 84], sizes = [14, 84], strides = [1, 1]} : vector<14x168xf32> to vector<14x84xf32>
    %43 = arith.maximumf %41, %42 : vector<14x84xf32>
    %44 = arith.truncf %43 : vector<14x84xf32> to vector<14x84xbf16>
    %45 = vector.extract_strided_slice %44 {offsets = [0, 0], sizes = [10, 84], strides = [1, 1]} : vector<14x84xbf16> to vector<10x84xbf16>
    %c0_26 = arith.constant 0 : index
    %c0_27 = arith.constant 0 : index
    %c0_28 = arith.constant 0 : index
    %46 = vector.load %arg2[%c0_26, %c0_27, %c0_28] : memref<5x84x160xbf16, #tpu.memory_space<vmem>>, vector<1x84x160xbf16>
    %47 = vector.shape_cast %46 : vector<1x84x160xbf16> to vector<84x160xbf16>
    %cst_29 = arith.constant dense<0.000000e+00> : vector<10x160xf32>
    %48 = tpu.matmul %45, %47, %cst_29 {dimension_numbers = #tpu.dot_dimension_numbers<[1], [0], [0], [1], [0, 0, 1, 1], [], []>} : vector<10x84xbf16>, vector<84x160xbf16>, vector<10x160xf32> -> vector<10x160xf32>
    %49 = vector.extract_strided_slice %44 {offsets = [1, 0], sizes = [10, 84], strides = [1, 1]} : vector<14x84xbf16> to vector<10x84xbf16>
    %c1_30 = arith.constant 1 : index
    %c0_31 = arith.constant 0 : index
    %c0_32 = arith.constant 0 : index
    %50 = vector.load %arg2[%c1_30, %c0_31, %c0_32] : memref<5x84x160xbf16, #tpu.memory_space<vmem>>, vector<1x84x160xbf16>
    %51 = vector.shape_cast %50 : vector<1x84x160xbf16> to vector<84x160xbf16>
    %cst_33 = arith.constant dense<0.000000e+00> : vector<10x160xf32>
    %52 = tpu.matmul %49, %51, %cst_33 {dimension_numbers = #tpu.dot_dimension_numbers<[1], [0], [0], [1], [0, 0, 1, 1], [], []>} : vector<10x84xbf16>, vector<84x160xbf16>, vector<10x160xf32> -> vector<10x160xf32>
    %53 = arith.addf %48, %52 : vector<10x160xf32>
    %54 = vector.extract_strided_slice %44 {offsets = [2, 0], sizes = [10, 84], strides = [1, 1]} : vector<14x84xbf16> to vector<10x84xbf16>
    %c2_34 = arith.constant 2 : index
    %c0_35 = arith.constant 0 : index
    %c0_36 = arith.constant 0 : index
    %55 = vector.load %arg2[%c2_34, %c0_35, %c0_36] : memref<5x84x160xbf16, #tpu.memory_space<vmem>>, vector<1x84x160xbf16>
    %56 = vector.shape_cast %55 : vector<1x84x160xbf16> to vector<84x160xbf16>
    %cst_37 = arith.constant dense<0.000000e+00> : vector<10x160xf32>
    %57 = tpu.matmul %54, %56, %cst_37 {dimension_numbers = #tpu.dot_dimension_numbers<[1], [0], [0], [1], [0, 0, 1, 1], [], []>} : vector<10x84xbf16>, vector<84x160xbf16>, vector<10x160xf32> -> vector<10x160xf32>
    %58 = arith.addf %53, %57 : vector<10x160xf32>
    %59 = vector.extract_strided_slice %44 {offsets = [3, 0], sizes = [10, 84], strides = [1, 1]} : vector<14x84xbf16> to vector<10x84xbf16>
    %c3_38 = arith.constant 3 : index
    %c0_39 = arith.constant 0 : index
    %c0_40 = arith.constant 0 : index
    %60 = vector.load %arg2[%c3_38, %c0_39, %c0_40] : memref<5x84x160xbf16, #tpu.memory_space<vmem>>, vector<1x84x160xbf16>
    %61 = vector.shape_cast %60 : vector<1x84x160xbf16> to vector<84x160xbf16>
    %cst_41 = arith.constant dense<0.000000e+00> : vector<10x160xf32>
    %62 = tpu.matmul %59, %61, %cst_41 {dimension_numbers = #tpu.dot_dimension_numbers<[1], [0], [0], [1], [0, 0, 1, 1], [], []>} : vector<10x84xbf16>, vector<84x160xbf16>, vector<10x160xf32> -> vector<10x160xf32>
    %63 = arith.addf %58, %62 : vector<10x160xf32>
    %64 = vector.extract_strided_slice %44 {offsets = [4, 0], sizes = [10, 84], strides = [1, 1]} : vector<14x84xbf16> to vector<10x84xbf16>
    %c4_42 = arith.constant 4 : index
    %c0_43 = arith.constant 0 : index
    %c0_44 = arith.constant 0 : index
    %65 = vector.load %arg2[%c4_42, %c0_43, %c0_44] : memref<5x84x160xbf16, #tpu.memory_space<vmem>>, vector<1x84x160xbf16>
    %66 = vector.shape_cast %65 : vector<1x84x160xbf16> to vector<84x160xbf16>
    %cst_45 = arith.constant dense<0.000000e+00> : vector<10x160xf32>
    %67 = tpu.matmul %64, %66, %cst_45 {dimension_numbers = #tpu.dot_dimension_numbers<[1], [0], [0], [1], [0, 0, 1, 1], [], []>} : vector<10x84xbf16>, vector<84x160xbf16>, vector<10x160xf32> -> vector<10x160xf32>
    %68 = arith.addf %63, %67 : vector<10x160xf32>
    %c1_46 = arith.constant 1 : index
    %c0_47 = arith.constant 0 : index
    %69 = vector.load %arg6[%c1_46, %c0_47] : memref<5x168xf32, #tpu.memory_space<vmem>>, vector<1x160xf32>
    %70 = vector.broadcast %69 : vector<1x160xf32> to vector<10x160xf32>
    %71 = arith.addf %68, %70 : vector<10x160xf32>
    %cst_48 = arith.constant 0.000000e+00 : f32
    %72 = vector.broadcast %cst_48 : f32 to vector<10x160xf32>
    %73 = arith.maximumf %71, %72 : vector<10x160xf32>
    %74 = arith.truncf %73 : vector<10x160xf32> to vector<10x160xbf16>
    %c28 = arith.constant 28 : index
    %c0_49 = arith.constant 0 : index
    %75 = vector.load %arg7[%c28, %c0_49] : memref<38x28xbf16, #tpu.memory_space<vmem>>, vector<10x10xbf16>
    %c168 = arith.constant 168 : index
    %c0_50 = arith.constant 0 : index
    %76 = vector.load %arg8[%c168, %c0_50] : memref<328x168xbf16, #tpu.memory_space<vmem>>, vector<160x160xbf16>
    %cst_51 = arith.constant dense<0.000000e+00> : vector<10x160xf32>
    %77 = tpu.matmul %75, %74, %cst_51 {dimension_numbers = #tpu.dot_dimension_numbers<[1], [0], [0], [1], [0, 0, 1, 1], [], []>} : vector<10x10xbf16>, vector<10x160xbf16>, vector<10x160xf32> -> vector<10x160xf32>
    %78 = vector.extract_strided_slice %77 {offsets = [0, 0], sizes = [5, 160], strides = [1, 1]} : vector<10x160xf32> to vector<5x160xf32>
    %79 = vector.extract_strided_slice %77 {offsets = [5, 0], sizes = [5, 160], strides = [1, 1]} : vector<10x160xf32> to vector<5x160xf32>
    %80 = arith.maximumf %78, %79 : vector<5x160xf32>
    %81 = arith.truncf %80 : vector<5x160xf32> to vector<5x160xbf16>
    %cst_52 = arith.constant dense<0.000000e+00> : vector<5x160xf32>
    %82 = tpu.matmul %81, %76, %cst_52 {dimension_numbers = #tpu.dot_dimension_numbers<[1], [0], [0], [1], [0, 0, 1, 1], [], []>} : vector<5x160xbf16>, vector<160x160xbf16>, vector<5x160xf32> -> vector<5x160xf32>
    %83 = vector.extract_strided_slice %82 {offsets = [0, 0], sizes = [5, 80], strides = [1, 1]} : vector<5x160xf32> to vector<5x80xf32>
    %84 = vector.extract_strided_slice %82 {offsets = [0, 80], sizes = [5, 80], strides = [1, 1]} : vector<5x160xf32> to vector<5x80xf32>
    %85 = arith.maximumf %83, %84 : vector<5x80xf32>
    %86 = arith.truncf %85 : vector<5x80xf32> to vector<5x80xbf16>
    %87 = vector.extract_strided_slice %86 {offsets = [0, 0], sizes = [1, 80], strides = [1, 1]} : vector<5x80xbf16> to vector<1x80xbf16>
    %c0_53 = arith.constant 0 : index
    %c0_54 = arith.constant 0 : index
    %c0_55 = arith.constant 0 : index
    %88 = vector.load %arg3[%c0_53, %c0_54, %c0_55] : memref<5x80x120xbf16, #tpu.memory_space<vmem>>, vector<1x80x120xbf16>
    %89 = vector.shape_cast %88 : vector<1x80x120xbf16> to vector<80x120xbf16>
    %cst_56 = arith.constant dense<0.000000e+00> : vector<1x120xf32>
    %90 = tpu.matmul %87, %89, %cst_56 {dimension_numbers = #tpu.dot_dimension_numbers<[1], [0], [0], [1], [0, 0, 1, 1], [], []>} : vector<1x80xbf16>, vector<80x120xbf16>, vector<1x120xf32> -> vector<1x120xf32>
    %91 = vector.extract_strided_slice %86 {offsets = [1, 0], sizes = [1, 80], strides = [1, 1]} : vector<5x80xbf16> to vector<1x80xbf16>
    %c1_57 = arith.constant 1 : index
    %c0_58 = arith.constant 0 : index
    %c0_59 = arith.constant 0 : index
    %92 = vector.load %arg3[%c1_57, %c0_58, %c0_59] : memref<5x80x120xbf16, #tpu.memory_space<vmem>>, vector<1x80x120xbf16>
    %93 = vector.shape_cast %92 : vector<1x80x120xbf16> to vector<80x120xbf16>
    %cst_60 = arith.constant dense<0.000000e+00> : vector<1x120xf32>
    %94 = tpu.matmul %91, %93, %cst_60 {dimension_numbers = #tpu.dot_dimension_numbers<[1], [0], [0], [1], [0, 0, 1, 1], [], []>} : vector<1x80xbf16>, vector<80x120xbf16>, vector<1x120xf32> -> vector<1x120xf32>
    %95 = arith.addf %90, %94 : vector<1x120xf32>
    %96 = vector.extract_strided_slice %86 {offsets = [2, 0], sizes = [1, 80], strides = [1, 1]} : vector<5x80xbf16> to vector<1x80xbf16>
    %c2_61 = arith.constant 2 : index
    %c0_62 = arith.constant 0 : index
    %c0_63 = arith.constant 0 : index
    %97 = vector.load %arg3[%c2_61, %c0_62, %c0_63] : memref<5x80x120xbf16, #tpu.memory_space<vmem>>, vector<1x80x120xbf16>
    %98 = vector.shape_cast %97 : vector<1x80x120xbf16> to vector<80x120xbf16>
    %cst_64 = arith.constant dense<0.000000e+00> : vector<1x120xf32>
    %99 = tpu.matmul %96, %98, %cst_64 {dimension_numbers = #tpu.dot_dimension_numbers<[1], [0], [0], [1], [0, 0, 1, 1], [], []>} : vector<1x80xbf16>, vector<80x120xbf16>, vector<1x120xf32> -> vector<1x120xf32>
    %100 = arith.addf %95, %99 : vector<1x120xf32>
    %101 = vector.extract_strided_slice %86 {offsets = [3, 0], sizes = [1, 80], strides = [1, 1]} : vector<5x80xbf16> to vector<1x80xbf16>
    %c3_65 = arith.constant 3 : index
    %c0_66 = arith.constant 0 : index
    %c0_67 = arith.constant 0 : index
    %102 = vector.load %arg3[%c3_65, %c0_66, %c0_67] : memref<5x80x120xbf16, #tpu.memory_space<vmem>>, vector<1x80x120xbf16>
    %103 = vector.shape_cast %102 : vector<1x80x120xbf16> to vector<80x120xbf16>
    %cst_68 = arith.constant dense<0.000000e+00> : vector<1x120xf32>
    %104 = tpu.matmul %101, %103, %cst_68 {dimension_numbers = #tpu.dot_dimension_numbers<[1], [0], [0], [1], [0, 0, 1, 1], [], []>} : vector<1x80xbf16>, vector<80x120xbf16>, vector<1x120xf32> -> vector<1x120xf32>
    %105 = arith.addf %100, %104 : vector<1x120xf32>
    %106 = vector.extract_strided_slice %86 {offsets = [4, 0], sizes = [1, 80], strides = [1, 1]} : vector<5x80xbf16> to vector<1x80xbf16>
    %c4_69 = arith.constant 4 : index
    %c0_70 = arith.constant 0 : index
    %c0_71 = arith.constant 0 : index
    %107 = vector.load %arg3[%c4_69, %c0_70, %c0_71] : memref<5x80x120xbf16, #tpu.memory_space<vmem>>, vector<1x80x120xbf16>
    %108 = vector.shape_cast %107 : vector<1x80x120xbf16> to vector<80x120xbf16>
    %cst_72 = arith.constant dense<0.000000e+00> : vector<1x120xf32>
    %109 = tpu.matmul %106, %108, %cst_72 {dimension_numbers = #tpu.dot_dimension_numbers<[1], [0], [0], [1], [0, 0, 1, 1], [], []>} : vector<1x80xbf16>, vector<80x120xbf16>, vector<1x120xf32> -> vector<1x120xf32>
    %110 = arith.addf %105, %109 : vector<1x120xf32>
    %c2_73 = arith.constant 2 : index
    %c0_74 = arith.constant 0 : index
    %111 = vector.load %arg6[%c2_73, %c0_74] : memref<5x168xf32, #tpu.memory_space<vmem>>, vector<1x120xf32>
    %112 = arith.addf %110, %111 : vector<1x120xf32>
    %cst_75 = arith.constant 0.000000e+00 : f32
    %113 = vector.broadcast %cst_75 : f32 to vector<1x120xf32>
    %114 = arith.maximumf %112, %113 : vector<1x120xf32>
    %115 = arith.truncf %114 : vector<1x120xf32> to vector<1x120xbf16>
    %c0_76 = arith.constant 0 : index
    %c0_77 = arith.constant 0 : index
    %116 = vector.load %arg4[%c0_76, %c0_77] : memref<120x128xbf16, #tpu.memory_space<vmem>>, vector<120x128xbf16>
    %cst_78 = arith.constant dense<0.000000e+00> : vector<1x128xf32>
    %117 = tpu.matmul %115, %116, %cst_78 {dimension_numbers = #tpu.dot_dimension_numbers<[1], [0], [0], [1], [0, 0, 1, 1], [], []>} : vector<1x120xbf16>, vector<120x128xbf16>, vector<1x128xf32> -> vector<1x128xf32>
    %c3_79 = arith.constant 3 : index
    %c0_80 = arith.constant 0 : index
    %118 = vector.load %arg6[%c3_79, %c0_80] : memref<5x168xf32, #tpu.memory_space<vmem>>, vector<1x128xf32>
    %119 = arith.addf %117, %118 : vector<1x128xf32>
    %cst_81 = arith.constant 0.000000e+00 : f32
    %120 = vector.broadcast %cst_81 : f32 to vector<1x128xf32>
    %121 = arith.maximumf %119, %120 : vector<1x128xf32>
    %122 = arith.truncf %121 : vector<1x128xf32> to vector<1x128xbf16>
    %c0_82 = arith.constant 0 : index
    %c0_83 = arith.constant 0 : index
    %123 = vector.load %arg5[%c0_82, %c0_83] : memref<128x128xbf16, #tpu.memory_space<vmem>>, vector<128x128xbf16>
    %cst_84 = arith.constant dense<0.000000e+00> : vector<1x128xf32>
    %124 = tpu.matmul %122, %123, %cst_84 {dimension_numbers = #tpu.dot_dimension_numbers<[1], [0], [0], [1], [0, 0, 1, 1], [], []>} : vector<1x128xbf16>, vector<128x128xbf16>, vector<1x128xf32> -> vector<1x128xf32>
    %c4_85 = arith.constant 4 : index
    %c0_86 = arith.constant 0 : index
    %125 = vector.load %arg6[%c4_85, %c0_86] : memref<5x168xf32, #tpu.memory_space<vmem>>, vector<1x128xf32>
    %126 = arith.addf %124, %125 : vector<1x128xf32>
    %127 = vector.extract_strided_slice %126 {offsets = [0, 0], sizes = [1, 10], strides = [1, 1]} : vector<1x128xf32> to vector<1x10xf32>
    %cst_87 = arith.constant dense<0xFF800000> : vector<1xf32>
    %128 = vector.multi_reduction <maximumf>, %127, %cst_87 [1] : vector<1x10xf32> to vector<1xf32>
    %129 = vector.shape_cast %128 : vector<1xf32> to vector<1x1xf32>
    %130 = vector.broadcast %129 : vector<1x1xf32> to vector<1x10xf32>
    %131 = arith.subf %127, %130 : vector<1x10xf32>
    %132 = math.exp %131 : vector<1x10xf32>
    %cst_88 = arith.constant dense<0.000000e+00> : vector<1xf32>
    %133 = vector.multi_reduction <add>, %132, %cst_88 [1] : vector<1x10xf32> to vector<1xf32>
    %134 = vector.shape_cast %133 : vector<1xf32> to vector<1x1xf32>
    %135 = vector.broadcast %134 : vector<1x1xf32> to vector<1x10xf32>
    %136 = arith.divf %132, %135 : vector<1x10xf32>
    %c0_89 = arith.constant 0 : index
    %c0_90 = arith.constant 0 : index
    %137 = vector.load %arg9[%c0_89, %c0_90] : memref<1x10xf32, #tpu.memory_space<vmem>>, vector<1x10xf32>
    tpu.vector_store %arg9[%c0_89, %c0_90], %136 {strides = array<i32>} : memref<1x10xf32, #tpu.memory_space<vmem>>, vector<1x10xf32>,
    return
  }
}

</mosaic_0001>

<llo_original>
// kernel: lenet5_forward.1
$region0: #{lenet5_forward.1}
  #allocation0 [shape = 'u32[]', space=smem, size = 0x4, offset = 0x4, fixed_abs, tag = 'smem constant byte address 0x4 - core index']
  #allocation1 [shape = 'u32[144,128]{1,0:T(1,128)}', space=vmem, size = 0x12000, scoped, tag = 'internal scratch']
  %s0 = inlined_call_operand.vmem [shape: f32[1,32,32], index: 0, kind: input, shape index: {}]
  %s1 = inlined_call_operand.vmem [shape: bf16[5,32,168], index: 1, kind: input, shape index: {}]
  %s2 = inlined_call_operand.vmem [shape: bf16[5,84,160], index: 2, kind: input, shape index: {}]
  %s3 = inlined_call_operand.vmem [shape: bf16[5,80,120], index: 3, kind: input, shape index: {}]
  %s4 = inlined_call_operand.vmem [shape: bf16[120,128], index: 4, kind: input, shape index: {}]
  %s5 = inlined_call_operand.vmem [shape: bf16[128,128], index: 5, kind: input, shape index: {}]
  %s6 = inlined_call_operand.vmem [shape: f32[5,168], index: 6, kind: input, shape index: {}]
  %s7 = inlined_call_operand.vmem [shape: bf16[38,28], index: 7, kind: input, shape index: {}]
  %s8 = inlined_call_operand.vmem [shape: bf16[328,168], index: 8, kind: input, shape index: {}]
  %s9 = inlined_call_operand.hbm [shape: f32[1,10], index: 9, kind: output, shape index: {}]
  %s10 = sld [smem:[#allocation0]]
  $region46: #{lenet5_forward.1} parent=0
    _
  %s12 = ssub.s32 1, %s10
  %s13 = scalar_select 0, %s12, %s10
  $region1: #{lenet5_forward.1} parent=0
    #allocation2 [shape = 'u8[512]{0}', space=vmem, size = 0x400, scoped, tag = 'output window, operand 0, single buffered']
    #allocation3 [shape = 's32[1]{0}', space=sflag, size = 0x4, scoped, tag = 'scoped memory for lenet5_forward.1']
    %14 = vsyncpa [#allocation3], 0
    // Predicated region
    $region2: #{lenet5_forward.1} parent=1 // pred_check
      _
    $region3: #{lenet5_forward.1} parent=1 // pred_check_branch
      %16 = sbr.rel (0) target = $region5
    $region4: #{lenet5_forward.1} parent=1 // pred_region
      _
    $region5: #{lenet5_forward.1} parent=1 // pred_fallthru
      _
    // Predicated region
    $region6: #{lenet5_forward.1} parent=1 // pred_check
      _
    $region7: #{lenet5_forward.1} parent=1 // pred_check_branch
      %18 = sbr.rel (0) target = $region9
    $region8: #{lenet5_forward.1} parent=1 // pred_region
      _
    $region9: #{lenet5_forward.1} parent=1 // pred_fallthru
      _
    // Predicated region
    $region10: #{lenet5_forward.1} parent=1 // pred_check
      _
    $region11: #{lenet5_forward.1} parent=1 // pred_check_branch
      %20 = sbr.rel (0) target = $region13
    $region12: #{lenet5_forward.1} parent=1 // pred_region
      _
    $region13: #{lenet5_forward.1} parent=1 // pred_fallthru
      _
    // Predicated region
    $region14: #{lenet5_forward.1} parent=1 // pred_check
      _
    $region15: #{lenet5_forward.1} parent=1 // pred_check_branch
      %22 = sbr.rel (0) target = $region17
    $region16: #{lenet5_forward.1} parent=1 // pred_region
      _
    $region17: #{lenet5_forward.1} parent=1 // pred_fallthru
      _
    // Predicated region
    $region18: #{lenet5_forward.1} parent=1 // pred_check
      _
    $region19: #{lenet5_forward.1} parent=1 // pred_check_branch
      %24 = sbr.rel (0) target = $region21
    $region20: #{lenet5_forward.1} parent=1 // pred_region
      _
    $region21: #{lenet5_forward.1} parent=1 // pred_fallthru
      _
    // Predicated region
    $region22: #{lenet5_forward.1} parent=1 // pred_check
      _
    $region23: #{lenet5_forward.1} parent=1 // pred_check_branch
      %26 = sbr.rel (0) target = $region25
    $region24: #{lenet5_forward.1} parent=1 // pred_region
      _
    $region25: #{lenet5_forward.1} parent=1 // pred_fallthru
      _
    // Predicated region
    $region26: #{lenet5_forward.1} parent=1 // pred_check
      _
    $region27: #{lenet5_forward.1} parent=1 // pred_check_branch
      %28 = sbr.rel (0) target = $region29
    $region28: #{lenet5_forward.1} parent=1 // pred_region
      _
    $region29: #{lenet5_forward.1} parent=1 // pred_fallthru
      _
    // Predicated region
    $region30: #{lenet5_forward.1} parent=1 // pred_check
      _
    $region31: #{lenet5_forward.1} parent=1 // pred_check_branch
      %30 = sbr.rel (0) target = $region33
    $region32: #{lenet5_forward.1} parent=1 // pred_region
      _
    $region33: #{lenet5_forward.1} parent=1 // pred_fallthru
      _
    // Predicated region
    $region34: #{lenet5_forward.1} parent=1 // pred_check
      _
    $region35: #{lenet5_forward.1} parent=1 // pred_check_branch
      %32 = sbr.rel (0) target = $region37
    $region36: #{lenet5_forward.1} parent=1 // pred_region
      _
    $region37: #{lenet5_forward.1} parent=1 // pred_fallthru
      _
    %v34 = vld [vmem:[%s0] sm:$0xff]
    %v35 = vld [vmem:[%s0 + $0x8] sm:$0xff]
    %v36 = vld [vmem:[%s0 + $0x10] sm:$0xff]
    %v37 = vld [vmem:[%s0 + $0x18] sm:$0xff]
    %v38 = vpack.c.bf16 %v35, %v34
    %v39 = vpack.c.bf16 %v37, %v36
    %v40 = vld [vmem:[%s1] sm:$0xff]
    %v41 = vld [vmem:[%s1 + $0x8] sm:$0xff]
    %v42 = vld [vmem:[%s1 + $0x10] sm:$0xff]
    %v43 = vld [vmem:[%s1 + $0x18] sm:$0xff]
    %s44 = scalar_lea.vmem %s1, 32
    %v45 = vld [vmem:[%s44] sm:$0xff]
    %v46 = vld [vmem:[%s44 + $0x8] sm:$0xff]
    %v47 = vld [vmem:[%s44 + $0x10] sm:$0xff]
    %v48 = vld [vmem:[%s44 + $0x18] sm:$0xff]
    %vm49 = vsmask.f32 7424
    %v51 = vshrl.u32 %v38, 16
    %v53 = vshll.u32 %v38, 16
    %v55 = vrot.slane %v53, 1
    %v56 = vor.u32 %v51, %v55
    %v58 = vshll.u32 %v39, 16
    %v60 = vrot.slane %v58, 1
    %v61 = vsel %vm49, %v56, %v60
    %v62 = vshrl.u32 %v39, 16
    %v64 = vor.u32 %v62, %v60
    %v69 = vunpack.c.l.b16 %v45
    %v70 = vunpack.c.h.b16 %v45
    %v71 = vunpack.c.l.b16 %v46
    %v72 = vunpack.c.h.b16 %v46
    %v73 = vunpack.c.l.b16 %v47
    %v74 = vunpack.c.h.b16 %v47
    %v75 = vunpack.c.l.b16 %v48
    %v76 = vunpack.c.h.b16 %v48
    %v77 = vpack.c.b16 %v71, %v69
    %v78 = vpack.c.b16 %v72, %v70
    %v79 = vpack.c.b16 %v75, %v73
    %v80 = vpack.c.b16 %v76, %v74
    %vm85 = vcmask 261120
    %v87 = vsel %vm85, %v61, 0
    %v90 = vsel %vm85, %v64, 0
    %92 = vmatprep.subr.bf16.mxu0 %v78
    %93 = vmatpush1.bf16.msra.mxu0 %v77
    %94 = vmatprep.subr.bf16.mxu0 %v80
    %95 = vmatpush1.bf16.msra.mxu0 %v79
    %96 = vmatprep.subr.bf16.mxu0 0
    %97 = vmatpush1.bf16.msra.mxu0 0
    %98 = vmatprep.subr.bf16.mxu0 0
    %99 = vmatpush1.bf16.msra.mxu0 0
    %100 = vmatprep.subr.bf16.mxu0 0
    %101 = vmatpush1.bf16.msra.mxu0 0
    %102 = vmatprep.subr.bf16.mxu0 0
    %103 = vmatpush1.bf16.msra.mxu0 0
    %104 = vmatprep.subr.bf16.mxu0 0
    %105 = vmatpush1.bf16.msra.mxu0 0
    %106 = vmatprep.subr.bf16.mxu0 0
    %107 = vmatpush1.bf16.msra.mxu0 0
    %108 = vmatprep.subr.bf16.mxu0 0
    %109 = vmatpush1.bf16.msra.mxu0 0
    %110 = vmatprep.subr.bf16.mxu0 0
    %111 = vmatpush1.bf16.msra.mxu0 0
    %112 = vmatprep.subr.bf16.mxu0 0
    %113 = vmatpush1.bf16.msra.mxu0 0
    %114 = vmatprep.subr.bf16.mxu0 0
    %115 = vmatpush1.bf16.msra.mxu0 0
    %116 = vmatprep.subr.bf16.mxu0 0
    %117 = vmatpush1.bf16.msra.mxu0 0
    %118 = vmatprep.subr.bf16.mxu0 0
    %119 = vmatpush1.bf16.msra.mxu0 0
    %120 = vmatprep.subr.bf16.mxu0 0
    %121 = vmatpush1.bf16.msra.mxu0 0
    %122 = vmatprep.subr.bf16.mxu0 0
    %123 = vmatpush1.bf16.msra.mxu0 0
    %124 = vmatprep.mubr.bf16.mxu0 0
    %125 = vmatmul.mubr.bf16.gmra.mrb[0].mxu0 %v87
    %v126 = vpop.f32.mrb[0].mxu0
    %v127 = vadd.f32 0.0, %v126
    %v128 = vpop.f32.mrb[0].mxu0
    %v129 = vadd.f32 0.0, %v128
    %v130 = vpop.f32.mrb[0].mxu0
    %v131 = vadd.f32 0.0, %v130
    %v132 = vpop.f32.mrb[0].mxu0
    %v133 = vadd.f32 0.0, %v132
    %134 = vmatprep.mubr.bf16.mxu0 0
    %135 = vmatmul.mubr.bf16.gmra.mrb[0].mxu0 %v90
    %v136 = vpop.f32.mrb[0].mxu0
    %v137 = vadd.f32 0.0, %v136
    %v138 = vpop.f32.mrb[0].mxu0
    %v139 = vadd.f32 0.0, %v138
    %v140 = vpop.f32.mrb[0].mxu0
    %v141 = vadd.f32 0.0, %v140
    %v142 = vpop.f32.mrb[0].mxu0
    %v143 = vadd.f32 0.0, %v142
    %144 = vdwg.mxu0
    %v149 = vunpack.c.l.b16 %v40
    %v150 = vunpack.c.h.b16 %v40
    %v151 = vunpack.c.l.b16 %v41
    %v152 = vunpack.c.h.b16 %v41
    %v153 = vunpack.c.l.b16 %v42
    %v154 = vunpack.c.h.b16 %v42
    %v155 = vunpack.c.l.b16 %v43
    %v156 = vunpack.c.h.b16 %v43
    %v157 = vpack.c.b16 %v151, %v149
    %v158 = vpack.c.b16 %v152, %v150
    %v159 = vpack.c.b16 %v155, %v153
    %v160 = vpack.c.b16 %v156, %v154
    %v165 = vsel %vm85, %v38, 0
    %v167 = vsel %vm85, %v39, 0
    %169 = vmatprep.subr.bf16.mxu0 %v158
    %170 = vmatpush1.bf16.msra.mxu0 %v157
    %171 = vmatprep.subr.bf16.mxu0 %v160
    %172 = vmatpush1.bf16.msra.mxu0 %v159
    %173 = vmatprep.subr.bf16.mxu0 0
    %174 = vmatpush1.bf16.msra.mxu0 0
    %175 = vmatprep.subr.bf16.mxu0 0
    %176 = vmatpush1.bf16.msra.mxu0 0
    %177 = vmatprep.subr.bf16.mxu0 0
    %178 = vmatpush1.bf16.msra.mxu0 0
    %179 = vmatprep.subr.bf16.mxu0 0
    %180 = vmatpush1.bf16.msra.mxu0 0
    %181 = vmatprep.subr.bf16.mxu0 0
    %182 = vmatpush1.bf16.msra.mxu0 0
    %183 = vmatprep.subr.bf16.mxu0 0
    %184 = vmatpush1.bf16.msra.mxu0 0
    %185 = vmatprep.subr.bf16.mxu0 0
    %186 = vmatpush1.bf16.msra.mxu0 0
    %187 = vmatprep.subr.bf16.mxu0 0
    %188 = vmatpush1.bf16.msra.mxu0 0
    %189 = vmatprep.subr.bf16.mxu0 0
    %190 = vmatpush1.bf16.msra.mxu0 0
    %191 = vmatprep.subr.bf16.mxu0 0
    %192 = vmatpush1.bf16.msra.mxu0 0
    %193 = vmatprep.subr.bf16.mxu0 0
    %194 = vmatpush1.bf16.msra.mxu0 0
    %195 = vmatprep.subr.bf16.mxu0 0
    %196 = vmatpush1.bf16.msra.mxu0 0
    %197 = vmatprep.subr.bf16.mxu0 0
    %198 = vmatpush1.bf16.msra.mxu0 0
    %199 = vmatprep.subr.bf16.mxu0 0
    %200 = vmatpush1.bf16.msra.mxu0 0
    %201 = vmatprep.mubr.bf16.mxu0 0
    %202 = vmatmul.mubr.bf16.gmra.mrb[0].mxu0 %v165
    %v203 = vpop.f32.mrb[0].mxu0
    %v204 = vadd.f32 %v127, %v203
    %v205 = vpop.f32.mrb[0].mxu0
    %v206 = vadd.f32 %v129, %v205
    %v207 = vpop.f32.mrb[0].mxu0
    %v208 = vadd.f32 %v131, %v207
    %v209 = vpop.f32.mrb[0].mxu0
    %v210 = vadd.f32 %v133, %v209
    %211 = vmatprep.mubr.bf16.mxu0 0
    %212 = vmatmul.mubr.bf16.gmra.mrb[0].mxu0 %v167
    %v213 = vpop.f32.mrb[0].mxu0
    %v214 = vadd.f32 %v137, %v213
    %v215 = vpop.f32.mrb[0].mxu0
    %v216 = vadd.f32 %v139, %v215
    %v217 = vpop.f32.mrb[0].mxu0
    %v218 = vadd.f32 %v141, %v217
    %v219 = vpop.f32.mrb[0].mxu0
    %v220 = vadd.f32 %v143, %v219
    %221 = vdwg.mxu0
    %s222 = scalar_lea.vmem %s1, 64
    %v223 = vld [vmem:[%s222] sm:$0xff]
    %v224 = vld [vmem:[%s222 + $0x8] sm:$0xff]
    %v225 = vld [vmem:[%s222 + $0x10] sm:$0xff]
    %v226 = vld [vmem:[%s222 + $0x18] sm:$0xff]
    %vm229 = vcmask 1046528
    %v230 = vrot.slane %v38, 1
    %v231 = vrot.slane %v39, 1
    %v232 = vsel %vm229, %v230, %v231
    %v237 = vunpack.c.l.b16 %v223
    %v238 = vunpack.c.h.b16 %v223
    %v239 = vunpack.c.l.b16 %v224
    %v240 = vunpack.c.h.b16 %v224
    %v241 = vunpack.c.l.b16 %v225
    %v242 = vunpack.c.h.b16 %v225
    %v243 = vunpack.c.l.b16 %v226
    %v244 = vunpack.c.h.b16 %v226
    %v245 = vpack.c.b16 %v239, %v237
    %v246 = vpack.c.b16 %v240, %v238
    %v247 = vpack.c.b16 %v243, %v241
    %v248 = vpack.c.b16 %v244, %v242
    %v254 = vsel %vm85, %v232, 0
    %v257 = vsel %vm85, %v231, 0
    %259 = vmatprep.subr.bf16.mxu0 %v246
    %260 = vmatpush1.bf16.msra.mxu0 %v245
    %261 = vmatprep.subr.bf16.mxu0 %v248
    %262 = vmatpush1.bf16.msra.mxu0 %v247
    %263 = vmatprep.subr.bf16.mxu0 0
    %264 = vmatpush1.bf16.msra.mxu0 0
    %265 = vmatprep.subr.bf16.mxu0 0
    %266 = vmatpush1.bf16.msra.mxu0 0
    %267 = vmatprep.subr.bf16.mxu0 0
    %268 = vmatpush1.bf16.msra.mxu0 0
    %269 = vmatprep.subr.bf16.mxu0 0
    %270 = vmatpush1.bf16.msra.mxu0 0
    %271 = vmatprep.subr.bf16.mxu0 0
    %272 = vmatpush1.bf16.msra.mxu0 0
    %273 = vmatprep.subr.bf16.mxu0 0
    %274 = vmatpush1.bf16.msra.mxu0 0
    %275 = vmatprep.subr.bf16.mxu0 0
    %276 = vmatpush1.bf16.msra.mxu0 0
    %277 = vmatprep.subr.bf16.mxu0 0
    %278 = vmatpush1.bf16.msra.mxu0 0
    %279 = vmatprep.subr.bf16.mxu0 0
    %280 = vmatpush1.bf16.msra.mxu0 0
    %281 = vmatprep.subr.bf16.mxu0 0
    %282 = vmatpush1.bf16.msra.mxu0 0
    %283 = vmatprep.subr.bf16.mxu0 0
    %284 = vmatpush1.bf16.msra.mxu0 0
    %285 = vmatprep.subr.bf16.mxu0 0
    %286 = vmatpush1.bf16.msra.mxu0 0
    %287 = vmatprep.subr.bf16.mxu0 0
    %288 = vmatpush1.bf16.msra.mxu0 0
    %289 = vmatprep.subr.bf16.mxu0 0
    %290 = vmatpush1.bf16.msra.mxu0 0
    %291 = vmatprep.mubr.bf16.mxu0 0
    %292 = vmatmul.mubr.bf16.gmra.mrb[0].mxu0 %v254
    %v293 = vpop.f32.mrb[0].mxu0
    %v294 = vadd.f32 0.0, %v293
    %v295 = vpop.f32.mrb[0].mxu0
    %v296 = vadd.f32 0.0, %v295
    %v297 = vpop.f32.mrb[0].mxu0
    %v298 = vadd.f32 0.0, %v297
    %v299 = vpop.f32.mrb[0].mxu0
    %v300 = vadd.f32 0.0, %v299
    %301 = vmatprep.mubr.bf16.mxu0 0
    %302 = vmatmul.mubr.bf16.gmra.mrb[0].mxu0 %v257
    %v303 = vpop.f32.mrb[0].mxu0
    %v304 = vadd.f32 0.0, %v303
    %v305 = vpop.f32.mrb[0].mxu0
    %v306 = vadd.f32 0.0, %v305
    %v307 = vpop.f32.mrb[0].mxu0
    %v308 = vadd.f32 0.0, %v307
    %v309 = vpop.f32.mrb[0].mxu0
    %v310 = vadd.f32 0.0, %v309
    %311 = vdwg.mxu0
    %v312 = vadd.f32 %v204, %v294
    %v313 = vadd.f32 %v206, %v296
    %v314 = vadd.f32 %v208, %v298
    %v315 = vadd.f32 %v210, %v300
    %v316 = vadd.f32 %v214, %v304
    %v317 = vadd.f32 %v216, %v306
    %v318 = vadd.f32 %v218, %v308
    %v319 = vadd.f32 %v220, %v310
    %s320 = scalar_lea.vmem %s1, 96
    %v321 = vld [vmem:[%s320] sm:$0xff]
    %v322 = vld [vmem:[%s320 + $0x8] sm:$0xff]
    %v323 = vld [vmem:[%s320 + $0x10] sm:$0xff]
    %v324 = vld [vmem:[%s320 + $0x18] sm:$0xff]
    %vm325 = vsmask.f32 6400
    %v326 = vrot.slane %v51, 1
    %v327 = vrot.slane %v53, 2
    %v328 = vor.u32 %v326, %v327
    %v329 = vrot.slane %v62, 1
    %v330 = vrot.slane %v58, 2
    %v331 = vor.u32 %v329, %v330
    %v332 = vsel %vm325, %v328, %v331
    %v337 = vunpack.c.l.b16 %v321
    %v338 = vunpack.c.h.b16 %v321
    %v339 = vunpack.c.l.b16 %v322
    %v340 = vunpack.c.h.b16 %v322
    %v341 = vunpack.c.l.b16 %v323
    %v342 = vunpack.c.h.b16 %v323
    %v343 = vunpack.c.l.b16 %v324
    %v344 = vunpack.c.h.b16 %v324
    %v345 = vpack.c.b16 %v339, %v337
    %v346 = vpack.c.b16 %v340, %v338
    %v347 = vpack.c.b16 %v343, %v341
    %v348 = vpack.c.b16 %v344, %v342
    %v354 = vsel %vm85, %v332, 0
    %v357 = vsel %vm85, %v331, 0
    %359 = vmatprep.subr.bf16.mxu0 %v346
    %360 = vmatpush1.bf16.msra.mxu0 %v345
    %361 = vmatprep.subr.bf16.mxu0 %v348
    %362 = vmatpush1.bf16.msra.mxu0 %v347
    %363 = vmatprep.subr.bf16.mxu0 0
    %364 = vmatpush1.bf16.msra.mxu0 0
    %365 = vmatprep.subr.bf16.mxu0 0
    %366 = vmatpush1.bf16.msra.mxu0 0
    %367 = vmatprep.subr.bf16.mxu0 0
    %368 = vmatpush1.bf16.msra.mxu0 0
    %369 = vmatprep.subr.bf16.mxu0 0
    %370 = vmatpush1.bf16.msra.mxu0 0
    %371 = vmatprep.subr.bf16.mxu0 0
    %372 = vmatpush1.bf16.msra.mxu0 0
    %373 = vmatprep.subr.bf16.mxu0 0
    %374 = vmatpush1.bf16.msra.mxu0 0
    %375 = vmatprep.subr.bf16.mxu0 0
    %376 = vmatpush1.bf16.msra.mxu0 0
    %377 = vmatprep.subr.bf16.mxu0 0
    %378 = vmatpush1.bf16.msra.mxu0 0
    %379 = vmatprep.subr.bf16.mxu0 0
    %380 = vmatpush1.bf16.msra.mxu0 0
    %381 = vmatprep.subr.bf16.mxu0 0
    %382 = vmatpush1.bf16.msra.mxu0 0
    %383 = vmatprep.subr.bf16.mxu0 0
    %384 = vmatpush1.bf16.msra.mxu0 0
    %385 = vmatprep.subr.bf16.mxu0 0
    %386 = vmatpush1.bf16.msra.mxu0 0
    %387 = vmatprep.subr.bf16.mxu0 0
    %388 = vmatpush1.bf16.msra.mxu0 0
    %389 = vmatprep.subr.bf16.mxu0 0
    %390 = vmatpush1.bf16.msra.mxu0 0
    %391 = vmatprep.mubr.bf16.mxu0 0
    %392 = vmatmul.mubr.bf16.gmra.mrb[0].mxu0 %v354
    %v393 = vpop.f32.mrb[0].mxu0
    %v394 = vadd.f32 0.0, %v393
    %v395 = vpop.f32.mrb[0].mxu0
    %v396 = vadd.f32 0.0, %v395
    %v397 = vpop.f32.mrb[0].mxu0
    %v398 = vadd.f32 0.0, %v397
    %v399 = vpop.f32.mrb[0].mxu0
    %v400 = vadd.f32 0.0, %v399
    %401 = vmatprep.mubr.bf16.mxu0 0
    %402 = vmatmul.mubr.bf16.gmra.mrb[0].mxu0 %v357
    %v403 = vpop.f32.mrb[0].mxu0
    %v404 = vadd.f32 0.0, %v403
    %v405 = vpop.f32.mrb[0].mxu0
    %v406 = vadd.f32 0.0, %v405
    %v407 = vpop.f32.mrb[0].mxu0
    %v408 = vadd.f32 0.0, %v407
    %v409 = vpop.f32.mrb[0].mxu0
    %v410 = vadd.f32 0.0, %v409
    %411 = vdwg.mxu0
    %v412 = vadd.f32 %v312, %v394
    %v413 = vadd.f32 %v313, %v396
    %v414 = vadd.f32 %v314, %v398
    %v415 = vadd.f32 %v315, %v400
    %v416 = vadd.f32 %v316, %v404
    %v417 = vadd.f32 %v317, %v406
    %v418 = vadd.f32 %v318, %v408
    %v419 = vadd.f32 %v319, %v410
    %s420 = scalar_lea.vmem %s1, 128
    %v421 = vld [vmem:[%s420] sm:$0xff]
    %v422 = vld [vmem:[%s420 + $0x8] sm:$0xff]
    %v423 = vld [vmem:[%s420 + $0x10] sm:$0xff]
    %v424 = vld [vmem:[%s420 + $0x18] sm:$0xff]
    %vm425 = vcmask 1045504
    %v426 = vrot.slane %v38, 2
    %v427 = vrot.slane %v39, 2
    %v428 = vsel %vm425, %v426, %v427
    %v433 = vunpack.c.l.b16 %v421
    %v434 = vunpack.c.h.b16 %v421
    %v435 = vunpack.c.l.b16 %v422
    %v436 = vunpack.c.h.b16 %v422
    %v437 = vunpack.c.l.b16 %v423
    %v438 = vunpack.c.h.b16 %v423
    %v439 = vunpack.c.l.b16 %v424
    %v440 = vunpack.c.h.b16 %v424
    %v441 = vpack.c.b16 %v435, %v433
    %v442 = vpack.c.b16 %v436, %v434
    %v443 = vpack.c.b16 %v439, %v437
    %v444 = vpack.c.b16 %v440, %v438
    %v450 = vsel %vm85, %v428, 0
    %v453 = vsel %vm85, %v427, 0
    %455 = vmatprep.subr.bf16.mxu0 %v442
    %456 = vmatpush1.bf16.msra.mxu0 %v441
    %457 = vmatprep.subr.bf16.mxu0 %v444
    %458 = vmatpush1.bf16.msra.mxu0 %v443
    %459 = vmatprep.subr.bf16.mxu0 0
    %460 = vmatpush1.bf16.msra.mxu0 0
    %461 = vmatprep.subr.bf16.mxu0 0
    %462 = vmatpush1.bf16.msra.mxu0 0
    %463 = vmatprep.subr.bf16.mxu0 0
    %464 = vmatpush1.bf16.msra.mxu0 0
    %465 = vmatprep.subr.bf16.mxu0 0
    %466 = vmatpush1.bf16.msra.mxu0 0
    %467 = vmatprep.subr.bf16.mxu0 0
    %468 = vmatpush1.bf16.msra.mxu0 0
    %469 = vmatprep.subr.bf16.mxu0 0
    %470 = vmatpush1.bf16.msra.mxu0 0
    %471 = vmatprep.subr.bf16.mxu0 0
    %472 = vmatpush1.bf16.msra.mxu0 0
    %473 = vmatprep.subr.bf16.mxu0 0
    %474 = vmatpush1.bf16.msra.mxu0 0
    %475 = vmatprep.subr.bf16.mxu0 0
    %476 = vmatpush1.bf16.msra.mxu0 0
    %477 = vmatprep.subr.bf16.mxu0 0
    %478 = vmatpush1.bf16.msra.mxu0 0
    %479 = vmatprep.subr.bf16.mxu0 0
    %480 = vmatpush1.bf16.msra.mxu0 0
    %481 = vmatprep.subr.bf16.mxu0 0
    %482 = vmatpush1.bf16.msra.mxu0 0
    %483 = vmatprep.subr.bf16.mxu0 0
    %484 = vmatpush1.bf16.msra.mxu0 0
    %485 = vmatprep.subr.bf16.mxu0 0
    %486 = vmatpush1.bf16.msra.mxu0 0
    %487 = vmatprep.mubr.bf16.mxu0 0
    %488 = vmatmul.mubr.bf16.gmra.mrb[0].mxu0 %v450
    %v489 = vpop.f32.mrb[0].mxu0
    %v490 = vadd.f32 0.0, %v489
    %v491 = vpop.f32.mrb[0].mxu0
    %v492 = vadd.f32 0.0, %v491
    %v493 = vpop.f32.mrb[0].mxu0
    %v494 = vadd.f32 0.0, %v493
    %v495 = vpop.f32.mrb[0].mxu0
    %v496 = vadd.f32 0.0, %v495
    %497 = vmatprep.mubr.bf16.mxu0 0
    %498 = vmatmul.mubr.bf16.gmra.mrb[0].mxu0 %v453
    %v499 = vpop.f32.mrb[0].mxu0
    %v500 = vadd.f32 0.0, %v499
    %v501 = vpop.f32.mrb[0].mxu0
    %v502 = vadd.f32 0.0, %v501
    %v503 = vpop.f32.mrb[0].mxu0
    %v504 = vadd.f32 0.0, %v503
    %v505 = vpop.f32.mrb[0].mxu0
    %v506 = vadd.f32 0.0, %v505
    %507 = vdwg.mxu0
    %v508 = vadd.f32 %v412, %v490
    %v509 = vadd.f32 %v413, %v492
    %v510 = vadd.f32 %v414, %v494
    %v511 = vadd.f32 %v415, %v496
    %v512 = vadd.f32 %v416, %v500
    %v513 = vadd.f32 %v417, %v502
    %v514 = vadd.f32 %v418, %v504
    %v515 = vadd.f32 %v419, %v506
    %v516 = vld [vmem:[%s6] ss:$8 sm:$0x3]
    %v518 = vlaneseq
    %v519 = vshrl.u32 %v518, 7
    %v520 = vsub.s32 0, %v519
    %v521 = vrot.slane %v516, %v520
    %v522 = vlaneseq
    %v523 = vshrl.u32 %v522, 7
    %v524 = vsub.s32 1, %v523
    %v525 = vrot.slane %v516, %v524
    %v528 = vadd.f32 %v508, %v521
    %v529 = vadd.f32 %v509, %v525
    %v530 = vadd.f32 %v510, %v521
    %v531 = vadd.f32 %v511, %v525
    %v532 = vadd.f32 %v512, %v521
    %v533 = vadd.f32 %v513, %v525
    %v534 = vadd.f32 %v514, %v521
    %v535 = vadd.f32 %v515, %v525
    %v536 = vmax.f32 %v528, 0.0
    %v537 = vmax.f32 %v529, 0.0
    %v538 = vmax.f32 %v530, 0.0
    %v539 = vmax.f32 %v531, 0.0
    %v540 = vmax.f32 %v532, 0.0
    %v541 = vmax.f32 %v533, 0.0
    %v542 = vmax.f32 %v534, 0.0
    %v543 = vmax.f32 %v535, 0.0
    %v544 = vpack.c.bf16 %v538, %v536
    %v545 = vpack.c.bf16 %v539, %v537
    %v546 = vpack.c.bf16 %v542, %v540
    %v547 = vpack.c.bf16 %v543, %v541
    %v548 = vld [vmem:[%s7] sm:$0xf]
    %v549 = vld [vmem:[%s7 + $0x4] sm:$0xf]
    %v550 = vld [vmem:[%s7 + $0x8] sm:$0xf]
    %v551 = vld [vmem:[%s7 + $0xc] sm:$0x3]
    %v552 = vld [vmem:[%s8] sm:$0xff]
    %v553 = vld [vmem:[%s8 + $0x8] sm:$0xff]
    %v554 = vld [vmem:[%s8 + $0x10] sm:$0xff]
    %v555 = vld [vmem:[%s8 + $0x18] sm:$0xff]
    %v556 = vld [vmem:[%s8 + $0x20] sm:$0xff]
    %v557 = vld [vmem:[%s8 + $0x28] sm:$0xff]
    %v558 = vld [vmem:[%s8 + $0x30] sm:$0xff]
    %v559 = vld [vmem:[%s8 + $0x38] sm:$0xff]
    %v560 = vld [vmem:[%s8 + $0x40] sm:$0xff]
    %v561 = vld [vmem:[%s8 + $0x48] sm:$0xff]
    %v562 = vld [vmem:[%s8 + $0x50] sm:$0xff]
    %v563 = vld [vmem:[%s8 + $0x58] sm:$0xff]
    %v564 = vld [vmem:[%s8 + $0x60] sm:$0xff]
    %v565 = vld [vmem:[%s8 + $0x68] sm:$0xff]
    %v566 = vld [vmem:[%s8 + $0x70] sm:$0xff]
    %v567 = vld [vmem:[%s8 + $0x78] sm:$0xff]
    %v568 = vld [vmem:[%s8 + $0x80] sm:$0xff]
    %v569 = vld [vmem:[%s8 + $0x88] sm:$0xff]
    %v570 = vld [vmem:[%s8 + $0x90] sm:$0xff]
    %v571 = vld [vmem:[%s8 + $0x98] sm:$0xff]
    %v572 = vld [vmem:[%s8 + $0xa0] sm:$0xff]
    %v577 = vunpack.c.l.b16 %v548
    %v578 = vunpack.c.l.b16 %v549
    %v579 = vunpack.c.l.b16 %v550
    %v580 = vunpack.c.l.b16 %v551
    %v581 = vpack.c.b16 %v578, %v577
    %v582 = vpack.c.b16 %v580, %v579
    %vm583 = vcmask 228352
    %v585 = vsel %vm583, %v581, 0
    %v588 = vsel %vm583, %v582, 0
    %vm590 = vcmask 1045504
    %v592 = vsel %vm590, %v546, 0
    %v595 = vsel %vm590, %v547, 0
    %597 = vmatprep.subr.bf16.mxu0 %v545
    %598 = vmatpush1.bf16.msra.mxu0 %v544
    %599 = vmatprep.subr.bf16.mxu0 %v595
    %600 = vmatpush1.bf16.msra.mxu0 %v592
    %601 = vmatprep.subr.bf16.mxu0 0
    %602 = vmatpush1.bf16.msra.mxu0 0
    %603 = vmatprep.subr.bf16.mxu0 0
    %604 = vmatpush1.bf16.msra.mxu0 0
    %605 = vmatprep.subr.bf16.mxu0 0
    %606 = vmatpush1.bf16.msra.mxu0 0
    %607 = vmatprep.subr.bf16.mxu0 0
    %608 = vmatpush1.bf16.msra.mxu0 0
    %609 = vmatprep.subr.bf16.mxu0 0
    %610 = vmatpush1.bf16.msra.mxu0 0
    %611 = vmatprep.subr.bf16.mxu0 0
    %612 = vmatpush1.bf16.msra.mxu0 0
    %613 = vmatprep.subr.bf16.mxu0 0
    %614 = vmatpush1.bf16.msra.mxu0 0
    %615 = vmatprep.subr.bf16.mxu0 0
    %616 = vmatpush1.bf16.msra.mxu0 0
    %617 = vmatprep.subr.bf16.mxu0 0
    %618 = vmatpush1.bf16.msra.mxu0 0
    %619 = vmatprep.subr.bf16.mxu0 0
    %620 = vmatpush1.bf16.msra.mxu0 0
    %621 = vmatprep.subr.bf16.mxu0 0
    %622 = vmatpush1.bf16.msra.mxu0 0
    %623 = vmatprep.subr.bf16.mxu0 0
    %624 = vmatpush1.bf16.msra.mxu0 0
    %625 = vmatprep.subr.bf16.mxu0 0
    %626 = vmatpush1.bf16.msra.mxu0 0
    %627 = vmatprep.subr.bf16.mxu0 0
    %628 = vmatpush1.bf16.msra.mxu0 0
    %629 = vmatprep.mubr.bf16.mxu0 0
    %630 = vmatmul.mubr.bf16.gmra.mrb[0].mxu0 %v585
    %v631 = vpop.f32.mrb[0].mxu0
    %v632 = vadd.f32 0.0, %v631
    %v633 = vpop.f32.mrb[0].mxu0
    %v634 = vadd.f32 0.0, %v633
    %v635 = vpop.f32.mrb[0].mxu0
    %v636 = vadd.f32 0.0, %v635
    %v637 = vpop.f32.mrb[0].mxu0
    %v638 = vadd.f32 0.0, %v637
    %639 = vmatprep.mubr.bf16.mxu0 0
    %640 = vmatmul.mubr.bf16.gmra.mrb[0].mxu0 %v588
    %v641 = vpop.f32.mrb[0].mxu0
    %v642 = vadd.f32 0.0, %v641
    %v643 = vpop.f32.mrb[0].mxu0
    %v644 = vadd.f32 0.0, %v643
    %v645 = vpop.f32.mrb[0].mxu0
    %v646 = vadd.f32 0.0, %v645
    %v647 = vpop.f32.mrb[0].mxu0
    %v648 = vadd.f32 0.0, %v647
    %649 = vdwg.mxu0
    %vm656 = vcmask 1041408
    %v657 = vrot.slane %v636, 6
    %v658 = vrot.slane %v642, 6
    %v659 = vsel %vm656, %v657, %v658
    %v660 = vrot.slane %v638, 6
    %v661 = vrot.slane %v644, 6
    %v662 = vsel %vm656, %v660, %v661
    %v663 = vrot.slane %v646, 6
    %v664 = vsel %vm656, %v658, %v663
    %v665 = vrot.slane %v648, 6
    %v666 = vsel %vm656, %v661, %v665
    %v671 = vmax.f32 %v632, %v659
    %v672 = vmax.f32 %v634, %v662
    %v673 = vmax.f32 %v636, %v664
    %v674 = vmax.f32 %v638, %v666
    %v675 = vpack.c.bf16 %v673, %v671
    %v676 = vpack.c.bf16 %v674, %v672
    %v698 = vunpack.c.l.b16 %v552
    %v699 = vunpack.c.h.b16 %v552
    %v700 = vunpack.c.l.b16 %v553
    %v701 = vunpack.c.h.b16 %v553
    %v702 = vunpack.c.l.b16 %v554
    %v703 = vunpack.c.h.b16 %v554
    %v704 = vunpack.c.l.b16 %v555
    %v705 = vunpack.c.h.b16 %v555
    %v706 = vunpack.c.l.b16 %v556
    %v707 = vunpack.c.h.b16 %v556
    %v708 = vunpack.c.l.b16 %v557
    %v709 = vunpack.c.h.b16 %v557
    %v710 = vunpack.c.l.b16 %v558
    %v711 = vunpack.c.h.b16 %v558
    %v712 = vunpack.c.l.b16 %v559
    %v713 = vunpack.c.h.b16 %v559
    %v714 = vunpack.c.l.b16 %v560
    %v715 = vunpack.c.h.b16 %v560
    %v716 = vunpack.c.l.b16 %v561
    %v717 = vunpack.c.h.b16 %v561
    %v718 = vunpack.c.l.b16 %v562
    %v719 = vunpack.c.h.b16 %v562
    %v720 = vunpack.c.l.b16 %v563
    %v721 = vunpack.c.h.b16 %v563
    %v722 = vunpack.c.l.b16 %v564
    %v723 = vunpack.c.h.b16 %v564
    %v724 = vunpack.c.l.b16 %v565
    %v725 = vunpack.c.h.b16 %v565
    %v726 = vunpack.c.l.b16 %v566
    %v727 = vunpack.c.h.b16 %v566
    %v728 = vunpack.c.l.b16 %v567
    %v729 = vunpack.c.h.b16 %v567
    %v730 = vunpack.c.l.b16 %v568
    %v731 = vunpack.c.h.b16 %v568
    %v732 = vunpack.c.l.b16 %v569
    %v733 = vunpack.c.h.b16 %v569
    %v734 = vunpack.c.l.b16 %v570
    %v735 = vunpack.c.h.b16 %v570
    %v736 = vunpack.c.l.b16 %v571
    %v737 = vunpack.c.h.b16 %v571
    %v738 = vunpack.c.l.b16 %v572
    %v739 = vunpack.c.h.b16 %v572
    %v740 = vpack.c.b16 %v700, %v698
    %v741 = vpack.c.b16 %v701, %v699
    %v742 = vpack.c.b16 %v704, %v702
    %v743 = vpack.c.b16 %v705, %v703
    %v744 = vpack.c.b16 %v708, %v706
    %v745 = vpack.c.b16 %v709, %v707
    %v746 = vpack.c.b16 %v712, %v710
    %v747 = vpack.c.b16 %v713, %v711
    %v748 = vpack.c.b16 %v716, %v714
    %v749 = vpack.c.b16 %v717, %v715
    %v750 = vpack.c.b16 %v720, %v718
    %v751 = vpack.c.b16 %v721, %v719
    %v752 = vpack.c.b16 %v724, %v722
    %v753 = vpack.c.b16 %v725, %v723
    %v754 = vpack.c.b16 %v728, %v726
    %v755 = vpack.c.b16 %v729, %v727
    %v756 = vpack.c.b16 %v732, %v730
    %v757 = vpack.c.b16 %v733, %v731
    %v758 = vpack.c.b16 %v736, %v734
    %v759 = vpack.c.b16 %v737, %v735
    %v760 = vpack.c.b16 %v738, %v738
    %v761 = vpack.c.b16 %v739, %v739
    %vm782 = vcmask 326656
    %v784 = vsel %vm782, %v676, 0
    %vm786 = vcmask 1043456
    %v788 = vsel %vm786, %v760, 0
    %v791 = vsel %vm786, %v761, 0
    %793 = vmatprep.subr.bf16.mxu0 %v741
    %794 = vmatpush1.bf16.msra.mxu0 %v740
    %795 = vmatprep.subr.bf16.mxu0 %v743
    %796 = vmatpush1.bf16.msra.mxu0 %v742
    %797 = vmatprep.subr.bf16.mxu0 %v745
    %798 = vmatpush1.bf16.msra.mxu0 %v744
    %799 = vmatprep.subr.bf16.mxu0 %v747
    %800 = vmatpush1.bf16.msra.mxu0 %v746
    %801 = vmatprep.subr.bf16.mxu0 %v749
    %802 = vmatpush1.bf16.msra.mxu0 %v748
    %803 = vmatprep.subr.bf16.mxu0 %v751
    %804 = vmatpush1.bf16.msra.mxu0 %v750
    %805 = vmatprep.subr.bf16.mxu0 %v753
    %806 = vmatpush1.bf16.msra.mxu0 %v752
    %807 = vmatprep.subr.bf16.mxu0 %v755
    %808 = vmatpush1.bf16.msra.mxu0 %v754
    %809 = vmatprep.subr.bf16.mxu0 %v757
    %810 = vmatpush1.bf16.msra.mxu0 %v756
    %811 = vmatprep.subr.bf16.mxu0 %v759
    %812 = vmatpush1.bf16.msra.mxu0 %v758
    %813 = vmatprep.subr.bf16.mxu0 %v791
    %814 = vmatpush1.bf16.msra.mxu0 %v788
    %815 = vmatprep.subr.bf16.mxu0 0
    %816 = vmatpush1.bf16.msra.mxu0 0
    %817 = vmatprep.subr.bf16.mxu0 0
    %818 = vmatpush1.bf16.msra.mxu0 0
    %819 = vmatprep.subr.bf16.mxu0 0
    %820 = vmatpush1.bf16.msra.mxu0 0
    %821 = vmatprep.subr.bf16.mxu0 0
    %822 = vmatpush1.bf16.msra.mxu0 0
    %823 = vmatprep.subr.bf16.mxu0 0
    %824 = vmatpush1.bf16.msra.mxu0 0
    %825 = vmatprep.mubr.bf16.mxu0 %v784
    %826 = vmatmul.mubr.bf16.gmra.mrb[0].mxu0 %v675
    %v827 = vpop.f32.mrb[0].mxu0
    %v828 = vadd.f32 0.0, %v827
    %v829 = vpop.f32.mrb[0].mxu0
    %v830 = vadd.f32 0.0, %v829
    %v831 = vpop.f32.mrb[0].mxu0
    %v832 = vadd.f32 0.0, %v831
    %v833 = vpop.f32.mrb[0].mxu0
    %v834 = vadd.f32 0.0, %v833
    %835 = vdwg.mxu0
    %840 = vrot.lane.b32.xlu0 %v828, 44
    %v841 = vpop.permute.xlu0 %840
    %842 = vrot.lane.b32.xlu0 %v830, 44
    %v843 = vpop.permute.xlu0 %842
    %844 = vrot.lane.b32.xlu0 %v832, 44
    %v845 = vpop.permute.xlu0 %844
    %846 = vrot.lane.b32.xlu0 %v834, 44
    %v847 = vpop.permute.xlu0 %846
    %vm848 = vcmask 359424
    %v849 = vsel %vm848, %v841, %v843
    %v850 = vsel %vm848, %v845, %v847
    %v853 = vmax.f32 %v828, %v849
    %v854 = vmax.f32 %v832, %v850
    %v855 = vpack.c.bf16 %v854, %v853
    %v856 = vld [vmem:[%s2] sm:$0xff]
    %v857 = vld [vmem:[%s2 + $0x8] sm:$0xff]
    %v858 = vld [vmem:[%s2 + $0x10] sm:$0xff]
    %v859 = vld [vmem:[%s2 + $0x18] sm:$0xff]
    %v860 = vld [vmem:[%s2 + $0x20] sm:$0xff]
    %v861 = vld [vmem:[%s2 + $0x28] sm:$0xff]
    %v862 = vld [vmem:[%s2 + $0x30] sm:$0xff]
    %v863 = vld [vmem:[%s2 + $0x38] sm:$0xff]
    %v864 = vld [vmem:[%s2 + $0x40] sm:$0xff]
    %v865 = vld [vmem:[%s2 + $0x48] sm:$0xff]
    %v866 = vld [vmem:[%s2 + $0x50] sm:$0x33]
    %s867 = scalar_lea.vmem %s2, 88
    %v868 = vld [vmem:[%s867] sm:$0xff]
    %v869 = vld [vmem:[%s867 + $0x8] sm:$0xff]
    %v870 = vld [vmem:[%s867 + $0x10] sm:$0xff]
    %v871 = vld [vmem:[%s867 + $0x18] sm:$0xff]
    %v872 = vld [vmem:[%s867 + $0x20] sm:$0xff]
    %v873 = vld [vmem:[%s867 + $0x28] sm:$0xff]
    %v874 = vld [vmem:[%s867 + $0x30] sm:$0xff]
    %v875 = vld [vmem:[%s867 + $0x38] sm:$0xff]
    %v876 = vld [vmem:[%s867 + $0x40] sm:$0xff]
    %v877 = vld [vmem:[%s867 + $0x48] sm:$0xff]
    %v878 = vld [vmem:[%s867 + $0x50] sm:$0x33]
    %v880 = vshrl.u32 %v855, 16
    %v882 = vshll.u32 %v855, 16
    %v884 = vrot.slane %v882, 1
    %v885 = vor.u32 %v880, %v884
    %v897 = vunpack.c.l.b16 %v868
    %v898 = vunpack.c.h.b16 %v868
    %v899 = vunpack.c.l.b16 %v869
    %v900 = vunpack.c.h.b16 %v869
    %v901 = vunpack.c.l.b16 %v870
    %v902 = vunpack.c.h.b16 %v870
    %v903 = vunpack.c.l.b16 %v871
    %v904 = vunpack.c.h.b16 %v871
    %v905 = vunpack.c.l.b16 %v872
    %v906 = vunpack.c.h.b16 %v872
    %v907 = vunpack.c.l.b16 %v873
    %v908 = vunpack.c.h.b16 %v873
    %v909 = vunpack.c.l.b16 %v874
    %v910 = vunpack.c.h.b16 %v874
    %v911 = vunpack.c.l.b16 %v875
    %v912 = vunpack.c.h.b16 %v875
    %v913 = vunpack.c.l.b16 %v876
    %v914 = vunpack.c.h.b16 %v876
    %v915 = vunpack.c.l.b16 %v877
    %v916 = vunpack.c.h.b16 %v877
    %v917 = vunpack.c.l.b16 %v878
    %v918 = vunpack.c.h.b16 %v878
    %v919 = vpack.c.b16 %v899, %v897
    %v920 = vpack.c.b16 %v900, %v898
    %v921 = vpack.c.b16 %v903, %v901
    %v922 = vpack.c.b16 %v904, %v902
    %v923 = vpack.c.b16 %v907, %v905
    %v924 = vpack.c.b16 %v908, %v906
    %v925 = vpack.c.b16 %v911, %v909
    %v926 = vpack.c.b16 %v912, %v910
    %v927 = vpack.c.b16 %v915, %v913
    %v928 = vpack.c.b16 %v916, %v914
    %v929 = vpack.c.b16 %v917, %v917
    %v930 = vpack.c.b16 %v918, %v918
    %vm941 = vcmask 687104
    %v943 = vsel %vm941, %v885, 0
    %v946 = vsel %vm656, %v929, 0
    %v949 = vsel %vm656, %v930, 0
    %951 = vmatprep.subr.bf16.mxu0 %v920
    %952 = vmatpush1.bf16.msra.mxu0 %v919
    %953 = vmatprep.subr.bf16.mxu0 %v922
    %954 = vmatpush1.bf16.msra.mxu0 %v921
    %955 = vmatprep.subr.bf16.mxu0 %v924
    %956 = vmatpush1.bf16.msra.mxu0 %v923
    %957 = vmatprep.subr.bf16.mxu0 %v926
    %958 = vmatpush1.bf16.msra.mxu0 %v925
    %959 = vmatprep.subr.bf16.mxu0 %v928
    %960 = vmatpush1.bf16.msra.mxu0 %v927
    %961 = vmatprep.subr.bf16.mxu0 %v949
    %962 = vmatpush1.bf16.msra.mxu0 %v946
    %963 = vmatprep.subr.bf16.mxu0 0
    %964 = vmatpush1.bf16.msra.mxu0 0
    %965 = vmatprep.subr.bf16.mxu0 0
    %966 = vmatpush1.bf16.msra.mxu0 0
    %967 = vmatprep.subr.bf16.mxu0 0
    %968 = vmatpush1.bf16.msra.mxu0 0
    %969 = vmatprep.subr.bf16.mxu0 0
    %970 = vmatpush1.bf16.msra.mxu0 0
    %971 = vmatprep.subr.bf16.mxu0 0
    %972 = vmatpush1.bf16.msra.mxu0 0
    %973 = vmatprep.subr.bf16.mxu0 0
    %974 = vmatpush1.bf16.msra.mxu0 0
    %975 = vmatprep.subr.bf16.mxu0 0
    %976 = vmatpush1.bf16.msra.mxu0 0
    %977 = vmatprep.subr.bf16.mxu0 0
    %978 = vmatpush1.bf16.msra.mxu0 0
    %979 = vmatprep.subr.bf16.mxu0 0
    %980 = vmatpush1.bf16.msra.mxu0 0
    %981 = vmatprep.subr.bf16.mxu0 0
    %982 = vmatpush1.bf16.msra.mxu0 0
    %983 = vmatprep.mubr.bf16.mxu0 0
    %984 = vmatmul.mubr.bf16.gmra.mrb[0].mxu0 %v943
    %v985 = vpop.f32.mrb[0].mxu0
    %v986 = vadd.f32 0.0, %v985
    %v987 = vpop.f32.mrb[0].mxu0
    %v988 = vadd.f32 0.0, %v987
    %v989 = vpop.f32.mrb[0].mxu0
    %v990 = vadd.f32 0.0, %v989
    %v991 = vpop.f32.mrb[0].mxu0
    %v992 = vadd.f32 0.0, %v991
    %993 = vdwg.mxu0
    %v1005 = vunpack.c.l.b16 %v856
    %v1006 = vunpack.c.h.b16 %v856
    %v1007 = vunpack.c.l.b16 %v857
    %v1008 = vunpack.c.h.b16 %v857
    %v1009 = vunpack.c.l.b16 %v858
    %v1010 = vunpack.c.h.b16 %v858
    %v1011 = vunpack.c.l.b16 %v859
    %v1012 = vunpack.c.h.b16 %v859
    %v1013 = vunpack.c.l.b16 %v860
    %v1014 = vunpack.c.h.b16 %v860
    %v1015 = vunpack.c.l.b16 %v861
    %v1016 = vunpack.c.h.b16 %v861
    %v1017 = vunpack.c.l.b16 %v862
    %v1018 = vunpack.c.h.b16 %v862
    %v1019 = vunpack.c.l.b16 %v863
    %v1020 = vunpack.c.h.b16 %v863
    %v1021 = vunpack.c.l.b16 %v864
    %v1022 = vunpack.c.h.b16 %v864
    %v1023 = vunpack.c.l.b16 %v865
    %v1024 = vunpack.c.h.b16 %v865
    %v1025 = vunpack.c.l.b16 %v866
    %v1026 = vunpack.c.h.b16 %v866
    %v1027 = vpack.c.b16 %v1007, %v1005
    %v1028 = vpack.c.b16 %v1008, %v1006
    %v1029 = vpack.c.b16 %v1011, %v1009
    %v1030 = vpack.c.b16 %v1012, %v1010
    %v1031 = vpack.c.b16 %v1015, %v1013
    %v1032 = vpack.c.b16 %v1016, %v1014
    %v1033 = vpack.c.b16 %v1019, %v1017
    %v1034 = vpack.c.b16 %v1020, %v1018
    %v1035 = vpack.c.b16 %v1023, %v1021
    %v1036 = vpack.c.b16 %v1024, %v1022
    %v1037 = vpack.c.b16 %v1025, %v1025
    %v1038 = vpack.c.b16 %v1026, %v1026
    %v1049 = vsel %vm941, %v855, 0
    %v1052 = vsel %vm656, %v1037, 0
    %v1055 = vsel %vm656, %v1038, 0
    %1057 = vmatprep.subr.bf16.mxu0 %v1028
    %1058 = vmatpush1.bf16.msra.mxu0 %v1027
    %1059 = vmatprep.subr.bf16.mxu0 %v1030
    %1060 = vmatpush1.bf16.msra.mxu0 %v1029
    %1061 = vmatprep.subr.bf16.mxu0 %v1032
    %1062 = vmatpush1.bf16.msra.mxu0 %v1031
    %1063 = vmatprep.subr.bf16.mxu0 %v1034
    %1064 = vmatpush1.bf16.msra.mxu0 %v1033
    %1065 = vmatprep.subr.bf16.mxu0 %v1036
    %1066 = vmatpush1.bf16.msra.mxu0 %v1035
    %1067 = vmatprep.subr.bf16.mxu0 %v1055
    %1068 = vmatpush1.bf16.msra.mxu0 %v1052
    %1069 = vmatprep.subr.bf16.mxu0 0
    %1070 = vmatpush1.bf16.msra.mxu0 0
    %1071 = vmatprep.subr.bf16.mxu0 0
    %1072 = vmatpush1.bf16.msra.mxu0 0
    %1073 = vmatprep.subr.bf16.mxu0 0
    %1074 = vmatpush1.bf16.msra.mxu0 0
    %1075 = vmatprep.subr.bf16.mxu0 0
    %1076 = vmatpush1.bf16.msra.mxu0 0
    %1077 = vmatprep.subr.bf16.mxu0 0
    %1078 = vmatpush1.bf16.msra.mxu0 0
    %1079 = vmatprep.subr.bf16.mxu0 0
    %1080 = vmatpush1.bf16.msra.mxu0 0
    %1081 = vmatprep.subr.bf16.mxu0 0
    %1082 = vmatpush1.bf16.msra.mxu0 0
    %1083 = vmatprep.subr.bf16.mxu0 0
    %1084 = vmatpush1.bf16.msra.mxu0 0
    %1085 = vmatprep.subr.bf16.mxu0 0
    %1086 = vmatpush1.bf16.msra.mxu0 0
    %1087 = vmatprep.subr.bf16.mxu0 0
    %1088 = vmatpush1.bf16.msra.mxu0 0
    %1089 = vmatprep.mubr.bf16.mxu0 0
    %1090 = vmatmul.mubr.bf16.gmra.mrb[0].mxu0 %v1049
    %v1091 = vpop.f32.mrb[0].mxu0
    %v1092 = vadd.f32 %v986, %v1091
    %v1093 = vpop.f32.mrb[0].mxu0
    %v1094 = vadd.f32 %v988, %v1093
    %v1095 = vpop.f32.mrb[0].mxu0
    %v1096 = vadd.f32 %v990, %v1095
    %v1097 = vpop.f32.mrb[0].mxu0
    %v1098 = vadd.f32 %v992, %v1097
    %1099 = vdwg.mxu0
    %s1100 = scalar_lea.vmem %s2, 176
    %v1101 = vld [vmem:[%s1100] sm:$0xff]
    %v1102 = vld [vmem:[%s1100 + $0x8] sm:$0xff]
    %v1103 = vld [vmem:[%s1100 + $0x10] sm:$0xff]
    %v1104 = vld [vmem:[%s1100 + $0x18] sm:$0xff]
    %v1105 = vld [vmem:[%s1100 + $0x20] sm:$0xff]
    %v1106 = vld [vmem:[%s1100 + $0x28] sm:$0xff]
    %v1107 = vld [vmem:[%s1100 + $0x30] sm:$0xff]
    %v1108 = vld [vmem:[%s1100 + $0x38] sm:$0xff]
    %v1109 = vld [vmem:[%s1100 + $0x40] sm:$0xff]
    %v1110 = vld [vmem:[%s1100 + $0x48] sm:$0xff]
    %v1111 = vld [vmem:[%s1100 + $0x50] sm:$0x33]
    %v1113 = vrot.slane %v855, 1
    %v1125 = vunpack.c.l.b16 %v1101
    %v1126 = vunpack.c.h.b16 %v1101
    %v1127 = vunpack.c.l.b16 %v1102
    %v1128 = vunpack.c.h.b16 %v1102
    %v1129 = vunpack.c.l.b16 %v1103
    %v1130 = vunpack.c.h.b16 %v1103
    %v1131 = vunpack.c.l.b16 %v1104
    %v1132 = vunpack.c.h.b16 %v1104
    %v1133 = vunpack.c.l.b16 %v1105
    %v1134 = vunpack.c.h.b16 %v1105
    %v1135 = vunpack.c.l.b16 %v1106
    %v1136 = vunpack.c.h.b16 %v1106
    %v1137 = vunpack.c.l.b16 %v1107
    %v1138 = vunpack.c.h.b16 %v1107
    %v1139 = vunpack.c.l.b16 %v1108
    %v1140 = vunpack.c.h.b16 %v1108
    %v1141 = vunpack.c.l.b16 %v1109
    %v1142 = vunpack.c.h.b16 %v1109
    %v1143 = vunpack.c.l.b16 %v1110
    %v1144 = vunpack.c.h.b16 %v1110
    %v1145 = vunpack.c.l.b16 %v1111
    %v1146 = vunpack.c.h.b16 %v1111
    %v1147 = vpack.c.b16 %v1127, %v1125
    %v1148 = vpack.c.b16 %v1128, %v1126
    %v1149 = vpack.c.b16 %v1131, %v1129
    %v1150 = vpack.c.b16 %v1132, %v1130
    %v1151 = vpack.c.b16 %v1135, %v1133
    %v1152 = vpack.c.b16 %v1136, %v1134
    %v1153 = vpack.c.b16 %v1139, %v1137
    %v1154 = vpack.c.b16 %v1140, %v1138
    %v1155 = vpack.c.b16 %v1143, %v1141
    %v1156 = vpack.c.b16 %v1144, %v1142
    %v1157 = vpack.c.b16 %v1145, %v1145
    %v1158 = vpack.c.b16 %v1146, %v1146
    %v1170 = vsel %vm941, %v1113, 0
    %v1173 = vsel %vm656, %v1157, 0
    %v1176 = vsel %vm656, %v1158, 0
    %1178 = vmatprep.subr.bf16.mxu0 %v1148
    %1179 = vmatpush1.bf16.msra.mxu0 %v1147
    %1180 = vmatprep.subr.bf16.mxu0 %v1150
    %1181 = vmatpush1.bf16.msra.mxu0 %v1149
    %1182 = vmatprep.subr.bf16.mxu0 %v1152
    %1183 = vmatpush1.bf16.msra.mxu0 %v1151
    %1184 = vmatprep.subr.bf16.mxu0 %v1154
    %1185 = vmatpush1.bf16.msra.mxu0 %v1153
    %1186 = vmatprep.subr.bf16.mxu0 %v1156
    %1187 = vmatpush1.bf16.msra.mxu0 %v1155
    %1188 = vmatprep.subr.bf16.mxu0 %v1176
    %1189 = vmatpush1.bf16.msra.mxu0 %v1173
    %1190 = vmatprep.subr.bf16.mxu0 0
    %1191 = vmatpush1.bf16.msra.mxu0 0
    %1192 = vmatprep.subr.bf16.mxu0 0
    %1193 = vmatpush1.bf16.msra.mxu0 0
    %1194 = vmatprep.subr.bf16.mxu0 0
    %1195 = vmatpush1.bf16.msra.mxu0 0
    %1196 = vmatprep.subr.bf16.mxu0 0
    %1197 = vmatpush1.bf16.msra.mxu0 0
    %1198 = vmatprep.subr.bf16.mxu0 0
    %1199 = vmatpush1.bf16.msra.mxu0 0
    %1200 = vmatprep.subr.bf16.mxu0 0
    %1201 = vmatpush1.bf16.msra.mxu0 0
    %1202 = vmatprep.subr.bf16.mxu0 0
    %1203 = vmatpush1.bf16.msra.mxu0 0
    %1204 = vmatprep.subr.bf16.mxu0 0
    %1205 = vmatpush1.bf16.msra.mxu0 0
    %1206 = vmatprep.subr.bf16.mxu0 0
    %1207 = vmatpush1.bf16.msra.mxu0 0
    %1208 = vmatprep.subr.bf16.mxu0 0
    %1209 = vmatpush1.bf16.msra.mxu0 0
    %1210 = vmatprep.mubr.bf16.mxu0 0
    %1211 = vmatmul.mubr.bf16.gmra.mrb[0].mxu0 %v1170
    %v1212 = vpop.f32.mrb[0].mxu0
    %v1213 = vadd.f32 0.0, %v1212
    %v1214 = vpop.f32.mrb[0].mxu0
    %v1215 = vadd.f32 0.0, %v1214
    %v1216 = vpop.f32.mrb[0].mxu0
    %v1217 = vadd.f32 0.0, %v1216
    %v1218 = vpop.f32.mrb[0].mxu0
    %v1219 = vadd.f32 0.0, %v1218
    %1220 = vdwg.mxu0
    %v1221 = vadd.f32 %v1092, %v1213
    %v1222 = vadd.f32 %v1094, %v1215
    %v1223 = vadd.f32 %v1096, %v1217
    %v1224 = vadd.f32 %v1098, %v1219
    %s1225 = scalar_lea.vmem %s2, 264
    %v1226 = vld [vmem:[%s1225] sm:$0xff]
    %v1227 = vld [vmem:[%s1225 + $0x8] sm:$0xff]
    %v1228 = vld [vmem:[%s1225 + $0x10] sm:$0xff]
    %v1229 = vld [vmem:[%s1225 + $0x18] sm:$0xff]
    %v1230 = vld [vmem:[%s1225 + $0x20] sm:$0xff]
    %v1231 = vld [vmem:[%s1225 + $0x28] sm:$0xff]
    %v1232 = vld [vmem:[%s1225 + $0x30] sm:$0xff]
    %v1233 = vld [vmem:[%s1225 + $0x38] sm:$0xff]
    %v1234 = vld [vmem:[%s1225 + $0x40] sm:$0xff]
    %v1235 = vld [vmem:[%s1225 + $0x48] sm:$0xff]
    %v1236 = vld [vmem:[%s1225 + $0x50] sm:$0x33]
    %v1237 = vrot.slane %v880, 1
    %v1238 = vrot.slane %v882, 2
    %v1239 = vor.u32 %v1237, %v1238
    %v1251 = vunpack.c.l.b16 %v1226
    %v1252 = vunpack.c.h.b16 %v1226
    %v1253 = vunpack.c.l.b16 %v1227
    %v1254 = vunpack.c.h.b16 %v1227
    %v1255 = vunpack.c.l.b16 %v1228
    %v1256 = vunpack.c.h.b16 %v1228
    %v1257 = vunpack.c.l.b16 %v1229
    %v1258 = vunpack.c.h.b16 %v1229
    %v1259 = vunpack.c.l.b16 %v1230
    %v1260 = vunpack.c.h.b16 %v1230
    %v1261 = vunpack.c.l.b16 %v1231
    %v1262 = vunpack.c.h.b16 %v1231
    %v1263 = vunpack.c.l.b16 %v1232
    %v1264 = vunpack.c.h.b16 %v1232
    %v1265 = vunpack.c.l.b16 %v1233
    %v1266 = vunpack.c.h.b16 %v1233
    %v1267 = vunpack.c.l.b16 %v1234
    %v1268 = vunpack.c.h.b16 %v1234
    %v1269 = vunpack.c.l.b16 %v1235
    %v1270 = vunpack.c.h.b16 %v1235
    %v1271 = vunpack.c.l.b16 %v1236
    %v1272 = vunpack.c.h.b16 %v1236
    %v1273 = vpack.c.b16 %v1253, %v1251
    %v1274 = vpack.c.b16 %v1254, %v1252
    %v1275 = vpack.c.b16 %v1257, %v1255
    %v1276 = vpack.c.b16 %v1258, %v1256
    %v1277 = vpack.c.b16 %v1261, %v1259
    %v1278 = vpack.c.b16 %v1262, %v1260
    %v1279 = vpack.c.b16 %v1265, %v1263
    %v1280 = vpack.c.b16 %v1266, %v1264
    %v1281 = vpack.c.b16 %v1269, %v1267
    %v1282 = vpack.c.b16 %v1270, %v1268
    %v1283 = vpack.c.b16 %v1271, %v1271
    %v1284 = vpack.c.b16 %v1272, %v1272
    %v1296 = vsel %vm941, %v1239, 0
    %v1299 = vsel %vm656, %v1283, 0
    %v1302 = vsel %vm656, %v1284, 0
    %1304 = vmatprep.subr.bf16.mxu0 %v1274
    %1305 = vmatpush1.bf16.msra.mxu0 %v1273
    %1306 = vmatprep.subr.bf16.mxu0 %v1276
    %1307 = vmatpush1.bf16.msra.mxu0 %v1275
    %1308 = vmatprep.subr.bf16.mxu0 %v1278
    %1309 = vmatpush1.bf16.msra.mxu0 %v1277
    %1310 = vmatprep.subr.bf16.mxu0 %v1280
    %1311 = vmatpush1.bf16.msra.mxu0 %v1279
    %1312 = vmatprep.subr.bf16.mxu0 %v1282
    %1313 = vmatpush1.bf16.msra.mxu0 %v1281
    %1314 = vmatprep.subr.bf16.mxu0 %v1302
    %1315 = vmatpush1.bf16.msra.mxu0 %v1299
    %1316 = vmatprep.subr.bf16.mxu0 0
    %1317 = vmatpush1.bf16.msra.mxu0 0
    %1318 = vmatprep.subr.bf16.mxu0 0
    %1319 = vmatpush1.bf16.msra.mxu0 0
    %1320 = vmatprep.subr.bf16.mxu0 0
    %1321 = vmatpush1.bf16.msra.mxu0 0
    %1322 = vmatprep.subr.bf16.mxu0 0
    %1323 = vmatpush1.bf16.msra.mxu0 0
    %1324 = vmatprep.subr.bf16.mxu0 0
    %1325 = vmatpush1.bf16.msra.mxu0 0
    %1326 = vmatprep.subr.bf16.mxu0 0
    %1327 = vmatpush1.bf16.msra.mxu0 0
    %1328 = vmatprep.subr.bf16.mxu0 0
    %1329 = vmatpush1.bf16.msra.mxu0 0
    %1330 = vmatprep.subr.bf16.mxu0 0
    %1331 = vmatpush1.bf16.msra.mxu0 0
    %1332 = vmatprep.subr.bf16.mxu0 0
    %1333 = vmatpush1.bf16.msra.mxu0 0
    %1334 = vmatprep.subr.bf16.mxu0 0
    %1335 = vmatpush1.bf16.msra.mxu0 0
    %1336 = vmatprep.mubr.bf16.mxu0 0
    %1337 = vmatmul.mubr.bf16.gmra.mrb[0].mxu0 %v1296
    %v1338 = vpop.f32.mrb[0].mxu0
    %v1339 = vadd.f32 0.0, %v1338
    %v1340 = vpop.f32.mrb[0].mxu0
    %v1341 = vadd.f32 0.0, %v1340
    %v1342 = vpop.f32.mrb[0].mxu0
    %v1343 = vadd.f32 0.0, %v1342
    %v1344 = vpop.f32.mrb[0].mxu0
    %v1345 = vadd.f32 0.0, %v1344
    %1346 = vdwg.mxu0
    %v1347 = vadd.f32 %v1221, %v1339
    %v1348 = vadd.f32 %v1222, %v1341
    %v1349 = vadd.f32 %v1223, %v1343
    %v1350 = vadd.f32 %v1224, %v1345
    %s1351 = scalar_lea.vmem %s2, 352
    %v1352 = vld [vmem:[%s1351] sm:$0xff]
    %v1353 = vld [vmem:[%s1351 + $0x8] sm:$0xff]
    %v1354 = vld [vmem:[%s1351 + $0x10] sm:$0xff]
    %v1355 = vld [vmem:[%s1351 + $0x18] sm:$0xff]
    %v1356 = vld [vmem:[%s1351 + $0x20] sm:$0xff]
    %v1357 = vld [vmem:[%s1351 + $0x28] sm:$0xff]
    %v1358 = vld [vmem:[%s1351 + $0x30] sm:$0xff]
    %v1359 = vld [vmem:[%s1351 + $0x38] sm:$0xff]
    %v1360 = vld [vmem:[%s1351 + $0x40] sm:$0xff]
    %v1361 = vld [vmem:[%s1351 + $0x48] sm:$0xff]
    %v1362 = vld [vmem:[%s1351 + $0x50] sm:$0x33]
    %v1363 = vrot.slane %v855, 2
    %v1375 = vunpack.c.l.b16 %v1352
    %v1376 = vunpack.c.h.b16 %v1352
    %v1377 = vunpack.c.l.b16 %v1353
    %v1378 = vunpack.c.h.b16 %v1353
    %v1379 = vunpack.c.l.b16 %v1354
    %v1380 = vunpack.c.h.b16 %v1354
    %v1381 = vunpack.c.l.b16 %v1355
    %v1382 = vunpack.c.h.b16 %v1355
    %v1383 = vunpack.c.l.b16 %v1356
    %v1384 = vunpack.c.h.b16 %v1356
    %v1385 = vunpack.c.l.b16 %v1357
    %v1386 = vunpack.c.h.b16 %v1357
    %v1387 = vunpack.c.l.b16 %v1358
    %v1388 = vunpack.c.h.b16 %v1358
    %v1389 = vunpack.c.l.b16 %v1359
    %v1390 = vunpack.c.h.b16 %v1359
    %v1391 = vunpack.c.l.b16 %v1360
    %v1392 = vunpack.c.h.b16 %v1360
    %v1393 = vunpack.c.l.b16 %v1361
    %v1394 = vunpack.c.h.b16 %v1361
    %v1395 = vunpack.c.l.b16 %v1362
    %v1396 = vunpack.c.h.b16 %v1362
    %v1397 = vpack.c.b16 %v1377, %v1375
    %v1398 = vpack.c.b16 %v1378, %v1376
    %v1399 = vpack.c.b16 %v1381, %v1379
    %v1400 = vpack.c.b16 %v1382, %v1380
    %v1401 = vpack.c.b16 %v1385, %v1383
    %v1402 = vpack.c.b16 %v1386, %v1384
    %v1403 = vpack.c.b16 %v1389, %v1387
    %v1404 = vpack.c.b16 %v1390, %v1388
    %v1405 = vpack.c.b16 %v1393, %v1391
    %v1406 = vpack.c.b16 %v1394, %v1392
    %v1407 = vpack.c.b16 %v1395, %v1395
    %v1408 = vpack.c.b16 %v1396, %v1396
    %v1420 = vsel %vm941, %v1363, 0
    %v1423 = vsel %vm656, %v1407, 0
    %v1426 = vsel %vm656, %v1408, 0
    %1428 = vmatprep.subr.bf16.mxu0 %v1398
    %1429 = vmatpush1.bf16.msra.mxu0 %v1397
    %1430 = vmatprep.subr.bf16.mxu0 %v1400
    %1431 = vmatpush1.bf16.msra.mxu0 %v1399
    %1432 = vmatprep.subr.bf16.mxu0 %v1402
    %1433 = vmatpush1.bf16.msra.mxu0 %v1401
    %1434 = vmatprep.subr.bf16.mxu0 %v1404
    %1435 = vmatpush1.bf16.msra.mxu0 %v1403
    %1436 = vmatprep.subr.bf16.mxu0 %v1406
    %1437 = vmatpush1.bf16.msra.mxu0 %v1405
    %1438 = vmatprep.subr.bf16.mxu0 %v1426
    %1439 = vmatpush1.bf16.msra.mxu0 %v1423
    %1440 = vmatprep.subr.bf16.mxu0 0
    %1441 = vmatpush1.bf16.msra.mxu0 0
    %1442 = vmatprep.subr.bf16.mxu0 0
    %1443 = vmatpush1.bf16.msra.mxu0 0
    %1444 = vmatprep.subr.bf16.mxu0 0
    %1445 = vmatpush1.bf16.msra.mxu0 0
    %1446 = vmatprep.subr.bf16.mxu0 0
    %1447 = vmatpush1.bf16.msra.mxu0 0
    %1448 = vmatprep.subr.bf16.mxu0 0
    %1449 = vmatpush1.bf16.msra.mxu0 0
    %1450 = vmatprep.subr.bf16.mxu0 0
    %1451 = vmatpush1.bf16.msra.mxu0 0
    %1452 = vmatprep.subr.bf16.mxu0 0
    %1453 = vmatpush1.bf16.msra.mxu0 0
    %1454 = vmatprep.subr.bf16.mxu0 0
    %1455 = vmatpush1.bf16.msra.mxu0 0
    %1456 = vmatprep.subr.bf16.mxu0 0
    %1457 = vmatpush1.bf16.msra.mxu0 0
    %1458 = vmatprep.subr.bf16.mxu0 0
    %1459 = vmatpush1.bf16.msra.mxu0 0
    %1460 = vmatprep.mubr.bf16.mxu0 0
    %1461 = vmatmul.mubr.bf16.gmra.mrb[0].mxu0 %v1420
    %v1462 = vpop.f32.mrb[0].mxu0
    %v1463 = vadd.f32 0.0, %v1462
    %v1464 = vpop.f32.mrb[0].mxu0
    %v1465 = vadd.f32 0.0, %v1464
    %v1466 = vpop.f32.mrb[0].mxu0
    %v1467 = vadd.f32 0.0, %v1466
    %v1468 = vpop.f32.mrb[0].mxu0
    %v1469 = vadd.f32 0.0, %v1468
    %1470 = vdwg.mxu0
    %v1471 = vadd.f32 %v1347, %v1463
    %v1472 = vadd.f32 %v1348, %v1465
    %v1473 = vadd.f32 %v1349, %v1467
    %v1474 = vadd.f32 %v1350, %v1469
    %s1475 = scalar_lea.vmem %s6, 1
    %v1476 = vld [vmem:[%s1475] ss:$8 sm:$0x3]
    %v1478 = vlaneseq
    %v1479 = vshrl.u32 %v1478, 7
    %v1480 = vsub.s32 0, %v1479
    %v1481 = vrot.slane %v1476, %v1480
    %v1482 = vlaneseq
    %v1483 = vshrl.u32 %v1482, 7
    %v1484 = vsub.s32 1, %v1483
    %v1485 = vrot.slane %v1476, %v1484
    %v1488 = vadd.f32 %v1471, %v1481
    %v1489 = vadd.f32 %v1472, %v1485
    %v1490 = vadd.f32 %v1473, %v1481
    %v1491 = vadd.f32 %v1474, %v1485
    %v1492 = vmax.f32 %v1488, 0.0
    %v1493 = vmax.f32 %v1489, 0.0
    %v1494 = vmax.f32 %v1490, 0.0
    %v1495 = vmax.f32 %v1491, 0.0
    %v1496 = vpack.c.bf16 %v1494, %v1492
    %v1497 = vpack.c.bf16 %v1495, %v1493
    %v1498 = vld [vmem:[%s7 + $0xc] sm:$0xc]
    %v1499 = vld [vmem:[%s7 + $0x10] sm:$0x7]
    %v1500 = vld [vmem:[%s8 + $0xa8] sm:$0xff]
    %v1501 = vld [vmem:[%s8 + $0xb0] sm:$0xff]
    %v1502 = vld [vmem:[%s8 + $0xb8] sm:$0xff]
    %v1503 = vld [vmem:[%s8 + $0xc0] sm:$0xff]
    %v1504 = vld [vmem:[%s8 + $0xc8] sm:$0xff]
    %v1505 = vld [vmem:[%s8 + $0xd0] sm:$0xff]
    %v1506 = vld [vmem:[%s8 + $0xd8] sm:$0xff]
    %v1507 = vld [vmem:[%s8 + $0xe0] sm:$0xff]
    %v1508 = vld [vmem:[%s8 + $0xe8] sm:$0xff]
    %v1509 = vld [vmem:[%s8 + $0xf0] sm:$0xff]
    %v1510 = vld [vmem:[%s8 + $0xf8] sm:$0xff]
    %v1511 = vld [vmem:[%s8 + $0x100] sm:$0xff]
    %v1512 = vld [vmem:[%s8 + $0x108] sm:$0xff]
    %v1513 = vld [vmem:[%s8 + $0x110] sm:$0xff]
    %v1514 = vld [vmem:[%s8 + $0x118] sm:$0xff]
    %v1515 = vld [vmem:[%s8 + $0x120] sm:$0xff]
    %v1516 = vld [vmem:[%s8 + $0x128] sm:$0xff]
    %v1517 = vld [vmem:[%s8 + $0x130] sm:$0xff]
    %v1518 = vld [vmem:[%s8 + $0x138] sm:$0xff]
    %v1519 = vld [vmem:[%s8 + $0x140] sm:$0xff]
    %v1522 = vunpack.c.l.b16 %v1498
    %v1523 = vunpack.c.l.b16 %v1499
    %v1524 = vpack.c.b16 %v1523, %v1522
    %v1525 = vrot.slane %v1524, 2
    %vm1526 = vcmask 80896
    %v1528 = vsel %vm1526, %v1525, 0
    %vm1530 = vcmask 1044480
    %v1532 = vsel %vm1530, %v1496, 0
    %v1535 = vsel %vm1530, %v1497, 0
    %1537 = vmatprep.subr.bf16.mxu0 %v1535
    %1538 = vmatpush1.bf16.msra.mxu0 %v1532
    %1539 = vmatprep.subr.bf16.mxu0 0
    %1540 = vmatpush1.bf16.msra.mxu0 0
    %1541 = vmatprep.subr.bf16.mxu0 0
    %1542 = vmatpush1.bf16.msra.mxu0 0
    %1543 = vmatprep.subr.bf16.mxu0 0
    %1544 = vmatpush1.bf16.msra.mxu0 0
    %1545 = vmatprep.subr.bf16.mxu0 0
    %1546 = vmatpush1.bf16.msra.mxu0 0
    %1547 = vmatprep.subr.bf16.mxu0 0
    %1548 = vmatpush1.bf16.msra.mxu0 0
    %1549 = vmatprep.subr.bf16.mxu0 0
    %1550 = vmatpush1.bf16.msra.mxu0 0
    %1551 = vmatprep.subr.bf16.mxu0 0
    %1552 = vmatpush1.bf16.msra.mxu0 0
    %1553 = vmatprep.subr.bf16.mxu0 0
    %1554 = vmatpush1.bf16.msra.mxu0 0
    %1555 = vmatprep.subr.bf16.mxu0 0
    %1556 = vmatpush1.bf16.msra.mxu0 0
    %1557 = vmatprep.subr.bf16.mxu0 0
    %1558 = vmatpush1.bf16.msra.mxu0 0
    %1559 = vmatprep.subr.bf16.mxu0 0
    %1560 = vmatpush1.bf16.msra.mxu0 0
    %1561 = vmatprep.subr.bf16.mxu0 0
    %1562 = vmatpush1.bf16.msra.mxu0 0
    %1563 = vmatprep.subr.bf16.mxu0 0
    %1564 = vmatpush1.bf16.msra.mxu0 0
    %1565 = vmatprep.subr.bf16.mxu0 0
    %1566 = vmatpush1.bf16.msra.mxu0 0
    %1567 = vmatprep.subr.bf16.mxu0 0
    %1568 = vmatpush1.bf16.msra.mxu0 0
    %1569 = vmatprep.mubr.bf16.mxu0 0
    %1570 = vmatmul.mubr.bf16.gmra.mrb[0].mxu0 %v1528
    %v1571 = vpop.f32.mrb[0].mxu0
    %v1572 = vadd.f32 0.0, %v1571
    %v1573 = vpop.f32.mrb[0].mxu0
    %v1574 = vadd.f32 0.0, %v1573
    %v1575 = vpop.f32.mrb[0].mxu0
    %v1576 = vadd.f32 0.0, %v1575
    %v1577 = vpop.f32.mrb[0].mxu0
    %v1578 = vadd.f32 0.0, %v1577
    %1579 = vdwg.mxu0
    %vm1584 = vcmask 1042432
    %v1585 = vrot.slane %v1572, 5
    %v1586 = vrot.slane %v1576, 5
    %v1587 = vsel %vm1584, %v1585, %v1586
    %v1588 = vrot.slane %v1574, 5
    %v1589 = vrot.slane %v1578, 5
    %v1590 = vsel %vm1584, %v1588, %v1589
    %v1593 = vmax.f32 %v1572, %v1587
    %v1594 = vmax.f32 %v1574, %v1590
    %v1595 = vpack.c.bf16 %v1593, %v1593
    %v1596 = vpack.c.bf16 %v1594, %v1594
    %v1617 = vunpack.c.l.b16 %v1500
    %v1618 = vunpack.c.h.b16 %v1500
    %v1619 = vunpack.c.l.b16 %v1501
    %v1620 = vunpack.c.h.b16 %v1501
    %v1621 = vunpack.c.l.b16 %v1502
    %v1622 = vunpack.c.h.b16 %v1502
    %v1623 = vunpack.c.l.b16 %v1503
    %v1624 = vunpack.c.h.b16 %v1503
    %v1625 = vunpack.c.l.b16 %v1504
    %v1626 = vunpack.c.h.b16 %v1504
    %v1627 = vunpack.c.l.b16 %v1505
    %v1628 = vunpack.c.h.b16 %v1505
    %v1629 = vunpack.c.l.b16 %v1506
    %v1630 = vunpack.c.h.b16 %v1506
    %v1631 = vunpack.c.l.b16 %v1507
    %v1632 = vunpack.c.h.b16 %v1507
    %v1633 = vunpack.c.l.b16 %v1508
    %v1634 = vunpack.c.h.b16 %v1508
    %v1635 = vunpack.c.l.b16 %v1509
    %v1636 = vunpack.c.h.b16 %v1509
    %v1637 = vunpack.c.l.b16 %v1510
    %v1638 = vunpack.c.h.b16 %v1510
    %v1639 = vunpack.c.l.b16 %v1511
    %v1640 = vunpack.c.h.b16 %v1511
    %v1641 = vunpack.c.l.b16 %v1512
    %v1642 = vunpack.c.h.b16 %v1512
    %v1643 = vunpack.c.l.b16 %v1513
    %v1644 = vunpack.c.h.b16 %v1513
    %v1645 = vunpack.c.l.b16 %v1514
    %v1646 = vunpack.c.h.b16 %v1514
    %v1647 = vunpack.c.l.b16 %v1515
    %v1648 = vunpack.c.h.b16 %v1515
    %v1649 = vunpack.c.l.b16 %v1516
    %v1650 = vunpack.c.h.b16 %v1516
    %v1651 = vunpack.c.l.b16 %v1517
    %v1652 = vunpack.c.h.b16 %v1517
    %v1653 = vunpack.c.l.b16 %v1518
    %v1654 = vunpack.c.h.b16 %v1518
    %v1655 = vunpack.c.l.b16 %v1519
    %v1656 = vunpack.c.h.b16 %v1519
    %v1657 = vpack.c.b16 %v1619, %v1617
    %v1658 = vpack.c.b16 %v1620, %v1618
    %v1659 = vpack.c.b16 %v1623, %v1621
    %v1660 = vpack.c.b16 %v1624, %v1622
    %v1661 = vpack.c.b16 %v1627, %v1625
    %v1662 = vpack.c.b16 %v1628, %v1626
    %v1663 = vpack.c.b16 %v1631, %v1629
    %v1664 = vpack.c.b16 %v1632, %v1630
    %v1665 = vpack.c.b16 %v1635, %v1633
    %v1666 = vpack.c.b16 %v1636, %v1634
    %v1667 = vpack.c.b16 %v1639, %v1637
    %v1668 = vpack.c.b16 %v1640, %v1638
    %v1669 = vpack.c.b16 %v1643, %v1641
    %v1670 = vpack.c.b16 %v1644, %v1642
    %v1671 = vpack.c.b16 %v1647, %v1645
    %v1672 = vpack.c.b16 %v1648, %v1646
    %v1673 = vpack.c.b16 %v1651, %v1649
    %v1674 = vpack.c.b16 %v1652, %v1650
    %v1675 = vpack.c.b16 %v1655, %v1653
    %v1676 = vpack.c.b16 %v1656, %v1654
    %v1698 = vsel %vm85, %v1596, 0
    %1700 = vmatprep.subr.bf16.mxu0 %v1658
    %1701 = vmatpush1.bf16.msra.mxu0 %v1657
    %1702 = vmatprep.subr.bf16.mxu0 %v1660
    %1703 = vmatpush1.bf16.msra.mxu0 %v1659
    %1704 = vmatprep.subr.bf16.mxu0 %v1662
    %1705 = vmatpush1.bf16.msra.mxu0 %v1661
    %1706 = vmatprep.subr.bf16.mxu0 %v1664
    %1707 = vmatpush1.bf16.msra.mxu0 %v1663
    %1708 = vmatprep.subr.bf16.mxu0 %v1666
    %1709 = vmatpush1.bf16.msra.mxu0 %v1665
    %1710 = vmatprep.subr.bf16.mxu0 %v1668
    %1711 = vmatpush1.bf16.msra.mxu0 %v1667
    %1712 = vmatprep.subr.bf16.mxu0 %v1670
    %1713 = vmatpush1.bf16.msra.mxu0 %v1669
    %1714 = vmatprep.subr.bf16.mxu0 %v1672
    %1715 = vmatpush1.bf16.msra.mxu0 %v1671
    %1716 = vmatprep.subr.bf16.mxu0 %v1674
    %1717 = vmatpush1.bf16.msra.mxu0 %v1673
    %1718 = vmatprep.subr.bf16.mxu0 %v1676
    %1719 = vmatpush1.bf16.msra.mxu0 %v1675
    %1720 = vmatprep.subr.bf16.mxu0 0
    %1721 = vmatpush1.bf16.msra.mxu0 0
    %1722 = vmatprep.subr.bf16.mxu0 0
    %1723 = vmatpush1.bf16.msra.mxu0 0
    %1724 = vmatprep.subr.bf16.mxu0 0
    %1725 = vmatpush1.bf16.msra.mxu0 0
    %1726 = vmatprep.subr.bf16.mxu0 0
    %1727 = vmatpush1.bf16.msra.mxu0 0
    %1728 = vmatprep.subr.bf16.mxu0 0
    %1729 = vmatpush1.bf16.msra.mxu0 0
    %1730 = vmatprep.subr.bf16.mxu0 0
    %1731 = vmatpush1.bf16.msra.mxu0 0
    %1732 = vmatprep.mubr.bf16.mxu0 %v1698
    %1733 = vmatmul.mubr.bf16.gmra.mrb[0].mxu0 %v1595
    %v1734 = vpop.f32.mrb[0].mxu0
    %v1735 = vadd.f32 0.0, %v1734
    %v1736 = vpop.f32.mrb[0].mxu0
    %v1737 = vadd.f32 0.0, %v1736
    %v1738 = vpop.f32.mrb[0].mxu0
    %v1739 = vpop.f32.mrb[0].mxu0
    %1740 = vdwg.mxu0
    %1743 = vrot.lane.b32.xlu0 %v1735, 48
    %v1744 = vpop.permute.xlu0 %1743
    %1745 = vrot.lane.b32.xlu0 %v1737, 48
    %v1746 = vpop.permute.xlu0 %1745
    %vm1747 = vcmask 392192
    %v1748 = vsel %vm1747, %v1744, %v1746
    %v1750 = vmax.f32 %v1735, %v1748
    %v1751 = vpack.c.bf16 %v1750, %v1750
    %v1752 = vld [vmem:[%s3] sm:$0xf]
    %v1753 = vld [vmem:[%s3 + $0x4] sm:$0xf]
    %v1754 = vld [vmem:[%s3 + $0x8] sm:$0xf]
    %v1755 = vld [vmem:[%s3 + $0xc] sm:$0xf]
    %v1756 = vld [vmem:[%s3 + $0x10] sm:$0xf]
    %v1757 = vld [vmem:[%s3 + $0x14] sm:$0xf]
    %v1758 = vld [vmem:[%s3 + $0x18] sm:$0xf]
    %v1759 = vld [vmem:[%s3 + $0x1c] sm:$0xf]
    %v1760 = vld [vmem:[%s3 + $0x20] sm:$0xf]
    %v1761 = vld [vmem:[%s3 + $0x24] sm:$0xf]
    %s1762 = scalar_lea.vmem %s3, 40
    %v1763 = vld [vmem:[%s1762] sm:$0xf]
    %v1764 = vld [vmem:[%s1762 + $0x4] sm:$0xf]
    %v1765 = vld [vmem:[%s1762 + $0x8] sm:$0xf]
    %v1766 = vld [vmem:[%s1762 + $0xc] sm:$0xf]
    %v1767 = vld [vmem:[%s1762 + $0x10] sm:$0xf]
    %v1768 = vld [vmem:[%s1762 + $0x14] sm:$0xf]
    %v1769 = vld [vmem:[%s1762 + $0x18] sm:$0xf]
    %v1770 = vld [vmem:[%s1762 + $0x1c] sm:$0xf]
    %v1771 = vld [vmem:[%s1762 + $0x20] sm:$0xf]
    %v1772 = vld [vmem:[%s1762 + $0x24] sm:$0xf]
    %v1774 = vshrl.u32 %v1751, 16
    %v1786 = vunpack.c.l.b16 %v1763
    %v1787 = vunpack.c.l.b16 %v1764
    %v1788 = vunpack.c.l.b16 %v1765
    %v1789 = vunpack.c.l.b16 %v1766
    %v1790 = vunpack.c.l.b16 %v1767
    %v1791 = vunpack.c.l.b16 %v1768
    %v1792 = vunpack.c.l.b16 %v1769
    %v1793 = vunpack.c.l.b16 %v1770
    %v1794 = vunpack.c.l.b16 %v1771
    %v1795 = vunpack.c.l.b16 %v1772
    %v1796 = vpack.c.b16 %v1787, %v1786
    %v1797 = vpack.c.b16 %v1789, %v1788
    %v1798 = vpack.c.b16 %v1791, %v1790
    %v1799 = vpack.c.b16 %v1793, %v1792
    %v1800 = vpack.c.b16 %v1795, %v1794
    %vm1806 = vcmask 654336
    %v1808 = vsel %vm1806, %v1774, 0
    %1810 = vmatprep.subr.bf16.mxu0 0
    %1811 = vmatpush1.bf16.msra.mxu0 %v1796
    %1812 = vmatprep.subr.bf16.mxu0 0
    %1813 = vmatpush1.bf16.msra.mxu0 %v1797
    %1814 = vmatprep.subr.bf16.mxu0 0
    %1815 = vmatpush1.bf16.msra.mxu0 %v1798
    %1816 = vmatprep.subr.bf16.mxu0 0
    %1817 = vmatpush1.bf16.msra.mxu0 %v1799
    %1818 = vmatprep.subr.bf16.mxu0 0
    %1819 = vmatpush1.bf16.msra.mxu0 %v1800
    %1820 = vmatprep.subr.bf16.mxu0 0
    %1821 = vmatpush1.bf16.msra.mxu0 0
    %1822 = vmatprep.subr.bf16.mxu0 0
    %1823 = vmatpush1.bf16.msra.mxu0 0
    %1824 = vmatprep.subr.bf16.mxu0 0
    %1825 = vmatpush1.bf16.msra.mxu0 0
    %1826 = vmatprep.subr.bf16.mxu0 0
    %1827 = vmatpush1.bf16.msra.mxu0 0
    %1828 = vmatprep.subr.bf16.mxu0 0
    %1829 = vmatpush1.bf16.msra.mxu0 0
    %1830 = vmatprep.subr.bf16.mxu0 0
    %1831 = vmatpush1.bf16.msra.mxu0 0
    %1832 = vmatprep.subr.bf16.mxu0 0
    %1833 = vmatpush1.bf16.msra.mxu0 0
    %1834 = vmatprep.subr.bf16.mxu0 0
    %1835 = vmatpush1.bf16.msra.mxu0 0
    %1836 = vmatprep.subr.bf16.mxu0 0
    %1837 = vmatpush1.bf16.msra.mxu0 0
    %1838 = vmatprep.subr.bf16.mxu0 0
    %1839 = vmatpush1.bf16.msra.mxu0 0
    %1840 = vmatprep.subr.bf16.mxu0 0
    %1841 = vmatpush1.bf16.msra.mxu0 0
    %1842 = vmatprep.mubr.bf16.mxu0 0
    %1843 = vmatmul.mubr.bf16.gmra.mrb[0].mxu0 %v1808
    %v1844 = vpop.f32.mrb[0].mxu0
    %v1845 = vadd.f32 0.0, %v1844
    %v1846 = vpop.f32.mrb[0].mxu0
    %v1847 = vpop.f32.mrb[0].mxu0
    %v1848 = vpop.f32.mrb[0].mxu0
    %1849 = vdwg.mxu0
    %v1860 = vunpack.c.l.b16 %v1752
    %v1861 = vunpack.c.l.b16 %v1753
    %v1862 = vunpack.c.l.b16 %v1754
    %v1863 = vunpack.c.l.b16 %v1755
    %v1864 = vunpack.c.l.b16 %v1756
    %v1865 = vunpack.c.l.b16 %v1757
    %v1866 = vunpack.c.l.b16 %v1758
    %v1867 = vunpack.c.l.b16 %v1759
    %v1868 = vunpack.c.l.b16 %v1760
    %v1869 = vunpack.c.l.b16 %v1761
    %v1870 = vpack.c.b16 %v1861, %v1860
    %v1871 = vpack.c.b16 %v1863, %v1862
    %v1872 = vpack.c.b16 %v1865, %v1864
    %v1873 = vpack.c.b16 %v1867, %v1866
    %v1874 = vpack.c.b16 %v1869, %v1868
    %v1880 = vsel %vm1806, %v1751, 0
    %1882 = vmatprep.subr.bf16.mxu0 0
    %1883 = vmatpush1.bf16.msra.mxu0 %v1870
    %1884 = vmatprep.subr.bf16.mxu0 0
    %1885 = vmatpush1.bf16.msra.mxu0 %v1871
    %1886 = vmatprep.subr.bf16.mxu0 0
    %1887 = vmatpush1.bf16.msra.mxu0 %v1872
    %1888 = vmatprep.subr.bf16.mxu0 0
    %1889 = vmatpush1.bf16.msra.mxu0 %v1873
    %1890 = vmatprep.subr.bf16.mxu0 0
    %1891 = vmatpush1.bf16.msra.mxu0 %v1874
    %1892 = vmatprep.subr.bf16.mxu0 0
    %1893 = vmatpush1.bf16.msra.mxu0 0
    %1894 = vmatprep.subr.bf16.mxu0 0
    %1895 = vmatpush1.bf16.msra.mxu0 0
    %1896 = vmatprep.subr.bf16.mxu0 0
    %1897 = vmatpush1.bf16.msra.mxu0 0
    %1898 = vmatprep.subr.bf16.mxu0 0
    %1899 = vmatpush1.bf16.msra.mxu0 0
    %1900 = vmatprep.subr.bf16.mxu0 0
    %1901 = vmatpush1.bf16.msra.mxu0 0
    %1902 = vmatprep.subr.bf16.mxu0 0
    %1903 = vmatpush1.bf16.msra.mxu0 0
    %1904 = vmatprep.subr.bf16.mxu0 0
    %1905 = vmatpush1.bf16.msra.mxu0 0
    %1906 = vmatprep.subr.bf16.mxu0 0
    %1907 = vmatpush1.bf16.msra.mxu0 0
    %1908 = vmatprep.subr.bf16.mxu0 0
    %1909 = vmatpush1.bf16.msra.mxu0 0
    %1910 = vmatprep.subr.bf16.mxu0 0
    %1911 = vmatpush1.bf16.msra.mxu0 0
    %1912 = vmatprep.subr.bf16.mxu0 0
    %1913 = vmatpush1.bf16.msra.mxu0 0
    %1914 = vmatprep.mubr.bf16.mxu0 0
    %1915 = vmatmul.mubr.bf16.gmra.mrb[0].mxu0 %v1880
    %v1916 = vpop.f32.mrb[0].mxu0
    %v1917 = vadd.f32 %v1845, %v1916
    %v1918 = vpop.f32.mrb[0].mxu0
    %v1919 = vpop.f32.mrb[0].mxu0
    %v1920 = vpop.f32.mrb[0].mxu0
    %1921 = vdwg.mxu0
    %s1922 = scalar_lea.vmem %s3, 80
    %v1923 = vld [vmem:[%s1922] sm:$0xf]
    %v1924 = vld [vmem:[%s1922 + $0x4] sm:$0xf]
    %v1925 = vld [vmem:[%s1922 + $0x8] sm:$0xf]
    %v1926 = vld [vmem:[%s1922 + $0xc] sm:$0xf]
    %v1927 = vld [vmem:[%s1922 + $0x10] sm:$0xf]
    %v1928 = vld [vmem:[%s1922 + $0x14] sm:$0xf]
    %v1929 = vld [vmem:[%s1922 + $0x18] sm:$0xf]
    %v1930 = vld [vmem:[%s1922 + $0x1c] sm:$0xf]
    %v1931 = vld [vmem:[%s1922 + $0x20] sm:$0xf]
    %v1932 = vld [vmem:[%s1922 + $0x24] sm:$0xf]
    %v1934 = vrot.slane %v1751, 1
    %v1945 = vunpack.c.l.b16 %v1923
    %v1946 = vunpack.c.l.b16 %v1924
    %v1947 = vunpack.c.l.b16 %v1925
    %v1948 = vunpack.c.l.b16 %v1926
    %v1949 = vunpack.c.l.b16 %v1927
    %v1950 = vunpack.c.l.b16 %v1928
    %v1951 = vunpack.c.l.b16 %v1929
    %v1952 = vunpack.c.l.b16 %v1930
    %v1953 = vunpack.c.l.b16 %v1931
    %v1954 = vunpack.c.l.b16 %v1932
    %v1955 = vpack.c.b16 %v1946, %v1945
    %v1956 = vpack.c.b16 %v1948, %v1947
    %v1957 = vpack.c.b16 %v1950, %v1949
    %v1958 = vpack.c.b16 %v1952, %v1951
    %v1959 = vpack.c.b16 %v1954, %v1953
    %v1966 = vsel %vm1806, %v1934, 0
    %1968 = vmatprep.subr.bf16.mxu0 0
    %1969 = vmatpush1.bf16.msra.mxu0 %v1955
    %1970 = vmatprep.subr.bf16.mxu0 0
    %1971 = vmatpush1.bf16.msra.mxu0 %v1956
    %1972 = vmatprep.subr.bf16.mxu0 0
    %1973 = vmatpush1.bf16.msra.mxu0 %v1957
    %1974 = vmatprep.subr.bf16.mxu0 0
    %1975 = vmatpush1.bf16.msra.mxu0 %v1958
    %1976 = vmatprep.subr.bf16.mxu0 0
    %1977 = vmatpush1.bf16.msra.mxu0 %v1959
    %1978 = vmatprep.subr.bf16.mxu0 0
    %1979 = vmatpush1.bf16.msra.mxu0 0
    %1980 = vmatprep.subr.bf16.mxu0 0
    %1981 = vmatpush1.bf16.msra.mxu0 0
    %1982 = vmatprep.subr.bf16.mxu0 0
    %1983 = vmatpush1.bf16.msra.mxu0 0
    %1984 = vmatprep.subr.bf16.mxu0 0
    %1985 = vmatpush1.bf16.msra.mxu0 0
    %1986 = vmatprep.subr.bf16.mxu0 0
    %1987 = vmatpush1.bf16.msra.mxu0 0
    %1988 = vmatprep.subr.bf16.mxu0 0
    %1989 = vmatpush1.bf16.msra.mxu0 0
    %1990 = vmatprep.subr.bf16.mxu0 0
    %1991 = vmatpush1.bf16.msra.mxu0 0
    %1992 = vmatprep.subr.bf16.mxu0 0
    %1993 = vmatpush1.bf16.msra.mxu0 0
    %1994 = vmatprep.subr.bf16.mxu0 0
    %1995 = vmatpush1.bf16.msra.mxu0 0
    %1996 = vmatprep.subr.bf16.mxu0 0
    %1997 = vmatpush1.bf16.msra.mxu0 0
    %1998 = vmatprep.subr.bf16.mxu0 0
    %1999 = vmatpush1.bf16.msra.mxu0 0
    %2000 = vmatprep.mubr.bf16.mxu0 0
    %2001 = vmatmul.mubr.bf16.gmra.mrb[0].mxu0 %v1966
    %v2002 = vpop.f32.mrb[0].mxu0
    %v2003 = vadd.f32 0.0, %v2002
    %v2004 = vpop.f32.mrb[0].mxu0
    %v2005 = vpop.f32.mrb[0].mxu0
    %v2006 = vpop.f32.mrb[0].mxu0
    %2007 = vdwg.mxu0
    %v2008 = vadd.f32 %v1917, %v2003
    %s2009 = scalar_lea.vmem %s3, 120
    %v2010 = vld [vmem:[%s2009] sm:$0xf]
    %v2011 = vld [vmem:[%s2009 + $0x4] sm:$0xf]
    %v2012 = vld [vmem:[%s2009 + $0x8] sm:$0xf]
    %v2013 = vld [vmem:[%s2009 + $0xc] sm:$0xf]
    %v2014 = vld [vmem:[%s2009 + $0x10] sm:$0xf]
    %v2015 = vld [vmem:[%s2009 + $0x14] sm:$0xf]
    %v2016 = vld [vmem:[%s2009 + $0x18] sm:$0xf]
    %v2017 = vld [vmem:[%s2009 + $0x1c] sm:$0xf]
    %v2018 = vld [vmem:[%s2009 + $0x20] sm:$0xf]
    %v2019 = vld [vmem:[%s2009 + $0x24] sm:$0xf]
    %v2020 = vrot.slane %v1774, 1
    %v2031 = vunpack.c.l.b16 %v2010
    %v2032 = vunpack.c.l.b16 %v2011
    %v2033 = vunpack.c.l.b16 %v2012
    %v2034 = vunpack.c.l.b16 %v2013
    %v2035 = vunpack.c.l.b16 %v2014
    %v2036 = vunpack.c.l.b16 %v2015
    %v2037 = vunpack.c.l.b16 %v2016
    %v2038 = vunpack.c.l.b16 %v2017
    %v2039 = vunpack.c.l.b16 %v2018
    %v2040 = vunpack.c.l.b16 %v2019
    %v2041 = vpack.c.b16 %v2032, %v2031
    %v2042 = vpack.c.b16 %v2034, %v2033
    %v2043 = vpack.c.b16 %v2036, %v2035
    %v2044 = vpack.c.b16 %v2038, %v2037
    %v2045 = vpack.c.b16 %v2040, %v2039
    %v2052 = vsel %vm1806, %v2020, 0
    %2054 = vmatprep.subr.bf16.mxu0 0
    %2055 = vmatpush1.bf16.msra.mxu0 %v2041
    %2056 = vmatprep.subr.bf16.mxu0 0
    %2057 = vmatpush1.bf16.msra.mxu0 %v2042
    %2058 = vmatprep.subr.bf16.mxu0 0
    %2059 = vmatpush1.bf16.msra.mxu0 %v2043
    %2060 = vmatprep.subr.bf16.mxu0 0
    %2061 = vmatpush1.bf16.msra.mxu0 %v2044
    %2062 = vmatprep.subr.bf16.mxu0 0
    %2063 = vmatpush1.bf16.msra.mxu0 %v2045
    %2064 = vmatprep.subr.bf16.mxu0 0
    %2065 = vmatpush1.bf16.msra.mxu0 0
    %2066 = vmatprep.subr.bf16.mxu0 0
    %2067 = vmatpush1.bf16.msra.mxu0 0
    %2068 = vmatprep.subr.bf16.mxu0 0
    %2069 = vmatpush1.bf16.msra.mxu0 0
    %2070 = vmatprep.subr.bf16.mxu0 0
    %2071 = vmatpush1.bf16.msra.mxu0 0
    %2072 = vmatprep.subr.bf16.mxu0 0
    %2073 = vmatpush1.bf16.msra.mxu0 0
    %2074 = vmatprep.subr.bf16.mxu0 0
    %2075 = vmatpush1.bf16.msra.mxu0 0
    %2076 = vmatprep.subr.bf16.mxu0 0
    %2077 = vmatpush1.bf16.msra.mxu0 0
    %2078 = vmatprep.subr.bf16.mxu0 0
    %2079 = vmatpush1.bf16.msra.mxu0 0
    %2080 = vmatprep.subr.bf16.mxu0 0
    %2081 = vmatpush1.bf16.msra.mxu0 0
    %2082 = vmatprep.subr.bf16.mxu0 0
    %2083 = vmatpush1.bf16.msra.mxu0 0
    %2084 = vmatprep.subr.bf16.mxu0 0
    %2085 = vmatpush1.bf16.msra.mxu0 0
    %2086 = vmatprep.mubr.bf16.mxu0 0
    %2087 = vmatmul.mubr.bf16.gmra.mrb[0].mxu0 %v2052
    %v2088 = vpop.f32.mrb[0].mxu0
    %v2089 = vadd.f32 0.0, %v2088
    %v2090 = vpop.f32.mrb[0].mxu0
    %v2091 = vpop.f32.mrb[0].mxu0
    %v2092 = vpop.f32.mrb[0].mxu0
    %2093 = vdwg.mxu0
    %v2094 = vadd.f32 %v2008, %v2089
    %s2095 = scalar_lea.vmem %s3, 160
    %v2096 = vld [vmem:[%s2095] sm:$0xf]
    %v2097 = vld [vmem:[%s2095 + $0x4] sm:$0xf]
    %v2098 = vld [vmem:[%s2095 + $0x8] sm:$0xf]
    %v2099 = vld [vmem:[%s2095 + $0xc] sm:$0xf]
    %v2100 = vld [vmem:[%s2095 + $0x10] sm:$0xf]
    %v2101 = vld [vmem:[%s2095 + $0x14] sm:$0xf]
    %v2102 = vld [vmem:[%s2095 + $0x18] sm:$0xf]
    %v2103 = vld [vmem:[%s2095 + $0x1c] sm:$0xf]
    %v2104 = vld [vmem:[%s2095 + $0x20] sm:$0xf]
    %v2105 = vld [vmem:[%s2095 + $0x24] sm:$0xf]
    %v2106 = vrot.slane %v1751, 2
    %v2117 = vunpack.c.l.b16 %v2096
    %v2118 = vunpack.c.l.b16 %v2097
    %v2119 = vunpack.c.l.b16 %v2098
    %v2120 = vunpack.c.l.b16 %v2099
    %v2121 = vunpack.c.l.b16 %v2100
    %v2122 = vunpack.c.l.b16 %v2101
    %v2123 = vunpack.c.l.b16 %v2102
    %v2124 = vunpack.c.l.b16 %v2103
    %v2125 = vunpack.c.l.b16 %v2104
    %v2126 = vunpack.c.l.b16 %v2105
    %v2127 = vpack.c.b16 %v2118, %v2117
    %v2128 = vpack.c.b16 %v2120, %v2119
    %v2129 = vpack.c.b16 %v2122, %v2121
    %v2130 = vpack.c.b16 %v2124, %v2123
    %v2131 = vpack.c.b16 %v2126, %v2125
    %v2138 = vsel %vm1806, %v2106, 0
    %2140 = vmatprep.subr.bf16.mxu0 0
    %2141 = vmatpush1.bf16.msra.mxu0 %v2127
    %2142 = vmatprep.subr.bf16.mxu0 0
    %2143 = vmatpush1.bf16.msra.mxu0 %v2128
    %2144 = vmatprep.subr.bf16.mxu0 0
    %2145 = vmatpush1.bf16.msra.mxu0 %v2129
    %2146 = vmatprep.subr.bf16.mxu0 0
    %2147 = vmatpush1.bf16.msra.mxu0 %v2130
    %2148 = vmatprep.subr.bf16.mxu0 0
    %2149 = vmatpush1.bf16.msra.mxu0 %v2131
    %2150 = vmatprep.subr.bf16.mxu0 0
    %2151 = vmatpush1.bf16.msra.mxu0 0
    %2152 = vmatprep.subr.bf16.mxu0 0
    %2153 = vmatpush1.bf16.msra.mxu0 0
    %2154 = vmatprep.subr.bf16.mxu0 0
    %2155 = vmatpush1.bf16.msra.mxu0 0
    %2156 = vmatprep.subr.bf16.mxu0 0
    %2157 = vmatpush1.bf16.msra.mxu0 0
    %2158 = vmatprep.subr.bf16.mxu0 0
    %2159 = vmatpush1.bf16.msra.mxu0 0
    %2160 = vmatprep.subr.bf16.mxu0 0
    %2161 = vmatpush1.bf16.msra.mxu0 0
    %2162 = vmatprep.subr.bf16.mxu0 0
    %2163 = vmatpush1.bf16.msra.mxu0 0
    %2164 = vmatprep.subr.bf16.mxu0 0
    %2165 = vmatpush1.bf16.msra.mxu0 0
    %2166 = vmatprep.subr.bf16.mxu0 0
    %2167 = vmatpush1.bf16.msra.mxu0 0
    %2168 = vmatprep.subr.bf16.mxu0 0
    %2169 = vmatpush1.bf16.msra.mxu0 0
    %2170 = vmatprep.subr.bf16.mxu0 0
    %2171 = vmatpush1.bf16.msra.mxu0 0
    %2172 = vmatprep.mubr.bf16.mxu0 0
    %2173 = vmatmul.mubr.bf16.gmra.mrb[0].mxu0 %v2138
    %v2174 = vpop.f32.mrb[0].mxu0
    %v2175 = vadd.f32 0.0, %v2174
    %v2176 = vpop.f32.mrb[0].mxu0
    %v2177 = vpop.f32.mrb[0].mxu0
    %v2178 = vpop.f32.mrb[0].mxu0
    %2179 = vdwg.mxu0
    %v2180 = vadd.f32 %v2094, %v2175
    %v2181 = vld [vmem:[%s6 + $0x2] ss:$0 sm:$0xff]
    %v2182 = vadd.f32 %v2180, %v2181
    %v2183 = vmax.f32 %v2182, 0.0
    %v2184 = vpack.c.bf16 %v2183, %v2183
    %v2185 = vld [vmem:[%s4] sm:$0xf]
    %v2186 = vld [vmem:[%s4 + $0x4] sm:$0xf]
    %v2187 = vld [vmem:[%s4 + $0x8] sm:$0xf]
    %v2188 = vld [vmem:[%s4 + $0xc] sm:$0xf]
    %v2189 = vld [vmem:[%s4 + $0x10] sm:$0xf]
    %v2190 = vld [vmem:[%s4 + $0x14] sm:$0xf]
    %v2191 = vld [vmem:[%s4 + $0x18] sm:$0xf]
    %v2192 = vld [vmem:[%s4 + $0x1c] sm:$0xf]
    %v2193 = vld [vmem:[%s4 + $0x20] sm:$0xf]
    %v2194 = vld [vmem:[%s4 + $0x24] sm:$0xf]
    %v2195 = vld [vmem:[%s4 + $0x28] sm:$0xf]
    %v2196 = vld [vmem:[%s4 + $0x2c] sm:$0xf]
    %v2197 = vld [vmem:[%s4 + $0x30] sm:$0xf]
    %v2198 = vld [vmem:[%s4 + $0x34] sm:$0xf]
    %v2199 = vld [vmem:[%s4 + $0x38] sm:$0xf]
    %v2200 = vld [vmem:[%s6 + $0x3] ss:$0 sm:$0xff]
    %v2216 = vunpack.c.l.b16 %v2185
    %v2217 = vunpack.c.l.b16 %v2186
    %v2218 = vunpack.c.l.b16 %v2187
    %v2219 = vunpack.c.l.b16 %v2188
    %v2220 = vunpack.c.l.b16 %v2189
    %v2221 = vunpack.c.l.b16 %v2190
    %v2222 = vunpack.c.l.b16 %v2191
    %v2223 = vunpack.c.l.b16 %v2192
    %v2224 = vunpack.c.l.b16 %v2193
    %v2225 = vunpack.c.l.b16 %v2194
    %v2226 = vunpack.c.l.b16 %v2195
    %v2227 = vunpack.c.l.b16 %v2196
    %v2228 = vunpack.c.l.b16 %v2197
    %v2229 = vunpack.c.l.b16 %v2198
    %v2230 = vunpack.c.l.b16 %v2199
    %v2231 = vpack.c.b16 %v2217, %v2216
    %v2232 = vpack.c.b16 %v2219, %v2218
    %v2233 = vpack.c.b16 %v2221, %v2220
    %v2234 = vpack.c.b16 %v2223, %v2222
    %v2235 = vpack.c.b16 %v2225, %v2224
    %v2236 = vpack.c.b16 %v2227, %v2226
    %v2237 = vpack.c.b16 %v2229, %v2228
    %v2238 = vpack.c.b16 %v2230, %v2230
    %vm2246 = vcmask 982016
    %v2248 = vsel %vm2246, %v2184, 0
    %v2251 = vsel %vm786, %v2238, 0
    %2253 = vmatprep.subr.bf16.mxu0 0
    %2254 = vmatpush1.bf16.msra.mxu0 %v2231
    %2255 = vmatprep.subr.bf16.mxu0 0
    %2256 = vmatpush1.bf16.msra.mxu0 %v2232
    %2257 = vmatprep.subr.bf16.mxu0 0
    %2258 = vmatpush1.bf16.msra.mxu0 %v2233
    %2259 = vmatprep.subr.bf16.mxu0 0
    %2260 = vmatpush1.bf16.msra.mxu0 %v2234
    %2261 = vmatprep.subr.bf16.mxu0 0
    %2262 = vmatpush1.bf16.msra.mxu0 %v2235
    %2263 = vmatprep.subr.bf16.mxu0 0
    %2264 = vmatpush1.bf16.msra.mxu0 %v2236
    %2265 = vmatprep.subr.bf16.mxu0 0
    %2266 = vmatpush1.bf16.msra.mxu0 %v2237
    %2267 = vmatprep.subr.bf16.mxu0 0
    %2268 = vmatpush1.bf16.msra.mxu0 %v2251
    %2269 = vmatprep.subr.bf16.mxu0 0
    %2270 = vmatpush1.bf16.msra.mxu0 0
    %2271 = vmatprep.subr.bf16.mxu0 0
    %2272 = vmatpush1.bf16.msra.mxu0 0
    %2273 = vmatprep.subr.bf16.mxu0 0
    %2274 = vmatpush1.bf16.msra.mxu0 0
    %2275 = vmatprep.subr.bf16.mxu0 0
    %2276 = vmatpush1.bf16.msra.mxu0 0
    %2277 = vmatprep.subr.bf16.mxu0 0
    %2278 = vmatpush1.bf16.msra.mxu0 0
    %2279 = vmatprep.subr.bf16.mxu0 0
    %2280 = vmatpush1.bf16.msra.mxu0 0
    %2281 = vmatprep.subr.bf16.mxu0 0
    %2282 = vmatpush1.bf16.msra.mxu0 0
    %2283 = vmatprep.subr.bf16.mxu0 0
    %2284 = vmatpush1.bf16.msra.mxu0 0
    %2285 = vmatprep.mubr.bf16.mxu0 0
    %2286 = vmatmul.mubr.bf16.gmra.mrb[0].mxu0 %v2248
    %v2287 = vpop.f32.mrb[0].mxu0
    %v2288 = vadd.f32 %v2200, %v2287
    %v2289 = vpop.f32.mrb[0].mxu0
    %v2290 = vpop.f32.mrb[0].mxu0
    %v2291 = vpop.f32.mrb[0].mxu0
    %2292 = vdwg.mxu0
    %v2293 = vmax.f32 %v2288, 0.0
    %v2294 = vpack.c.bf16 %v2293, %v2293
    %v2295 = vld [vmem:[%s5] sm:$0xf]
    %v2296 = vld [vmem:[%s5 + $0x4] sm:$0xf]
    %v2297 = vld [vmem:[%s5 + $0x8] sm:$0xf]
    %v2298 = vld [vmem:[%s5 + $0xc] sm:$0xf]
    %v2299 = vld [vmem:[%s5 + $0x10] sm:$0xf]
    %v2300 = vld [vmem:[%s5 + $0x14] sm:$0xf]
    %v2301 = vld [vmem:[%s5 + $0x18] sm:$0xf]
    %v2302 = vld [vmem:[%s5 + $0x1c] sm:$0xf]
    %v2303 = vld [vmem:[%s5 + $0x20] sm:$0xf]
    %v2304 = vld [vmem:[%s5 + $0x24] sm:$0xf]
    %v2305 = vld [vmem:[%s5 + $0x28] sm:$0xf]
    %v2306 = vld [vmem:[%s5 + $0x2c] sm:$0xf]
    %v2307 = vld [vmem:[%s5 + $0x30] sm:$0xf]
    %v2308 = vld [vmem:[%s5 + $0x34] sm:$0xf]
    %v2309 = vld [vmem:[%s5 + $0x38] sm:$0xf]
    %v2310 = vld [vmem:[%s5 + $0x3c] sm:$0xf]
    %v2311 = vld [vmem:[%s6 + $0x4] ss:$0 sm:$0xff]
    %v2328 = vunpack.c.l.b16 %v2295
    %v2329 = vunpack.c.l.b16 %v2296
    %v2330 = vunpack.c.l.b16 %v2297
    %v2331 = vunpack.c.l.b16 %v2298
    %v2332 = vunpack.c.l.b16 %v2299
    %v2333 = vunpack.c.l.b16 %v2300
    %v2334 = vunpack.c.l.b16 %v2301
    %v2335 = vunpack.c.l.b16 %v2302
    %v2336 = vunpack.c.l.b16 %v2303
    %v2337 = vunpack.c.l.b16 %v2304
    %v2338 = vunpack.c.l.b16 %v2305
    %v2339 = vunpack.c.l.b16 %v2306
    %v2340 = vunpack.c.l.b16 %v2307
    %v2341 = vunpack.c.l.b16 %v2308
    %v2342 = vunpack.c.l.b16 %v2309
    %v2343 = vunpack.c.l.b16 %v2310
    %v2344 = vpack.c.b16 %v2329, %v2328
    %v2345 = vpack.c.b16 %v2331, %v2330
    %v2346 = vpack.c.b16 %v2333, %v2332
    %v2347 = vpack.c.b16 %v2335, %v2334
    %v2348 = vpack.c.b16 %v2337, %v2336
    %v2349 = vpack.c.b16 %v2339, %v2338
    %v2350 = vpack.c.b16 %v2341, %v2340
    %v2351 = vpack.c.b16 %v2343, %v2342
    %2360 = vmatprep.subr.bf16.mxu0 0
    %2361 = vmatpush1.bf16.msra.mxu0 %v2344
    %2362 = vmatprep.subr.bf16.mxu0 0
    %2363 = vmatpush1.bf16.msra.mxu0 %v2345
    %2364 = vmatprep.subr.bf16.mxu0 0
    %2365 = vmatpush1.bf16.msra.mxu0 %v2346
    %2366 = vmatprep.subr.bf16.mxu0 0
    %2367 = vmatpush1.bf16.msra.mxu0 %v2347
    %2368 = vmatprep.subr.bf16.mxu0 0
    %2369 = vmatpush1.bf16.msra.mxu0 %v2348
    %2370 = vmatprep.subr.bf16.mxu0 0
    %2371 = vmatpush1.bf16.msra.mxu0 %v2349
    %2372 = vmatprep.subr.bf16.mxu0 0
    %2373 = vmatpush1.bf16.msra.mxu0 %v2350
    %2374 = vmatprep.subr.bf16.mxu0 0
    %2375 = vmatpush1.bf16.msra.mxu0 %v2351
    %2376 = vmatprep.subr.bf16.mxu0 0
    %2377 = vmatpush1.bf16.msra.mxu0 0
    %2378 = vmatprep.subr.bf16.mxu0 0
    %2379 = vmatpush1.bf16.msra.mxu0 0
    %2380 = vmatprep.subr.bf16.mxu0 0
    %2381 = vmatpush1.bf16.msra.mxu0 0
    %2382 = vmatprep.subr.bf16.mxu0 0
    %2383 = vmatpush1.bf16.msra.mxu0 0
    %2384 = vmatprep.subr.bf16.mxu0 0
    %2385 = vmatpush1.bf16.msra.mxu0 0
    %2386 = vmatprep.subr.bf16.mxu0 0
    %2387 = vmatpush1.bf16.msra.mxu0 0
    %2388 = vmatprep.subr.bf16.mxu0 0
    %2389 = vmatpush1.bf16.msra.mxu0 0
    %2390 = vmatprep.subr.bf16.mxu0 0
    %2391 = vmatpush1.bf16.msra.mxu0 0
    %2392 = vmatprep.mubr.bf16.mxu0 0
    %2393 = vmatmul.mubr.bf16.gmra.mrb[0].mxu0 %v2294
    %v2394 = vpop.f32.mrb[0].mxu0
    %v2395 = vadd.f32 %v2311, %v2394
    %v2396 = vpop.f32.mrb[0].mxu0
    %v2397 = vpop.f32.mrb[0].mxu0
    %v2398 = vpop.f32.mrb[0].mxu0
    %2399 = vdwg.mxu0
    %vm2400 = vcmask 73728
    %v2401 = vsel %vm2400, %v2395, -inf
    %2402 = vmax.xlane.f32.xlu0 %v2401
    %v2403 = vpop.xlane.xlu0 %2402
    %v2404 = vsub.f32 %v2395, %v2403
    %v2405 = vmul.f32 %v2404, 1.442695
    %v2406 = vpow.pop %v2405
    %v2407 = vsel %vm2400, %v2406, 0.0
    %2408 = vadd.xlane.f32.xlu0 %v2407
    %v2409 = vpop.xlane.xlu0 %2408
    %v2410 = vrcp.pop %v2409
    %v2411 = vmul.f32 %v2406, %v2410
    %2412 = vst.msk [vmem:[#allocation2] sm:$0x1] %vm2400, %v2411
    // Predicated region
    $region38: #{lenet5_forward.1} parent=1 // pred_check
      _
    $region39: #{lenet5_forward.1} parent=1 // pred_check_branch
      %2414 = sbr.rel (0) target = $region41
    $region40: #{lenet5_forward.1} parent=1 // pred_region
      %s2416 = ssub.s32 16, 16
      %2417 = vsyncadd [#allocation3], %s2416
      %s2419 = sshll.u32 [#allocation2], 4
      %s2420 = int_to_ptr.vmem [resolvable:$true] %s2419
      %2422 = dma.vmem_to_hbm [thread:$0]  %s2420, 16, %s9, [#allocation3]
    $region41: #{lenet5_forward.1} parent=1 // pred_fallthru
      _
    // Predicated region
    $region42: #{lenet5_forward.1} parent=1 // pred_check
      _
    $region43: #{lenet5_forward.1} parent=1 // pred_check_branch
      %2424 = sbr.rel (0) target = $region45
    $region44: #{lenet5_forward.1} parent=1 // pred_region
      %2425 = dma.done [#allocation3], 16
    $region45: #{lenet5_forward.1} parent=1 // pred_fallthru
      _
    %2426 = vsyncpa [#allocation3], 1

</llo_original>
